<compile_context>
chip_gen: v7x
topology: tpu7x:2x2x1
jax: 0.10.0
libtpu: 0.0.40
codegen_flags: <defaults>
</compile_context>

<pallas_src>
import functools

import jax
import jax.numpy as jnp
from jax.experimental import pallas as pl
from jax.experimental.pallas import tpu as pltpu


VMEM_LIMIT = 32 * 1024 * 1024      # safe default on v5e/v6e/v7x; largest working set ~12 MB
TM_TARGET, TN_TARGET, TK_TARGET = 512, 512, 1536


# ------------------------------ tile selection ------------------------------ #

def _pick_tile(dim, target, align=128):
    """Largest multiple of `align` that divides `dim` and is <= target.
    Falls back to the full dim only for small / static weight dims."""
    if dim <= target:
        return dim
    t = (target // align) * align
    while t >= align:
        if dim % t == 0:
            return t
        t -= align
    return dim


def _pick_tile_pad(dim, target, align=128):
    """Tile + padded extent for the runtime-sized M dimension.  Never falls back
    to a huge full-dim block: pads up to a tile multiple instead."""
    if dim <= target:
        return dim, dim
    t = (target // align) * align
    while t >= align:
        if dim % t == 0:
            return t, dim
        t -= align
    t = (target // align) * align
    return t, ((dim + t - 1) // t) * t


# ------------------------------ GEMM kernels -------------------------------- #

def _apply_act(y, activation):
    if activation == "gelu":
        # TODO(synk): tanh-approximate GELU; HF/PyTorch BERT default is erf-based
        # (small systematic numeric drift vs the reference).
        y = 0.5 * y * (1.0 + jnp.tanh(0.7978845608028654 * (y + 0.044715 * y * y * y)))
    return y


def _linear_kernel_1k(x_ref, w_ref, b_ref, o_ref, *, activation):
    # single K step: no accumulator scratch, write dot + bias (+act) directly
    y = jnp.dot(x_ref[...], w_ref[...], preferred_element_type=jnp.float32)
    y = _apply_act(y + b_ref[...].astype(jnp.float32), activation)
    o_ref[...] = y.astype(o_ref.dtype)


def _linear_kernel_acc(x_ref, w_ref, b_ref, o_ref, acc_ref, *, activation):
    @pl.when(pl.program_id(2) == 0)
    def _():
        acc_ref[...] = jnp.zeros_like(acc_ref)

    acc_ref[...] += jnp.dot(x_ref[...], w_ref[...], preferred_element_type=jnp.float32)

    @pl.when(pl.program_id(2) == pl.num_programs(2) - 1)
    def _():
        y = _apply_act(acc_ref[...] + b_ref[...].astype(jnp.float32), activation)
        o_ref[...] = y.astype(o_ref.dtype)


def linear(x, w, b, activation=None, out_dtype=None):
    """y = act(x @ w + b), (M, N, K)-tiled with bf16 MXU matmuls / f32 accumulation."""
    M, K = x.shape
    K2, N = w.shape
    assert K == K2
    out_dtype = x.dtype if out_dtype is None else out_dtype

    tm, Mp = _pick_tile_pad(M, TM_TARGET)
    tn = _pick_tile(N, TN_TARGET)
    tk = _pick_tile(K, TK_TARGET)
    if Mp != M:
        x = jnp.pad(x, ((0, Mp - M), (0, 0)))
    nk = K // tk
    b2 = b.reshape(1, N)

    if nk == 1:
        out = pl.pallas_call(
            functools.partial(_linear_kernel_1k, activation=activation),
            out_shape=jax.ShapeDtypeStruct((Mp, N), out_dtype),
            grid=(Mp // tm, N // tn),
            in_specs=[
                pl.BlockSpec((tm, K), lambda i, j: (i, 0)),
                pl.BlockSpec((K, tn), lambda i, j: (0, j)),
                pl.BlockSpec((1, tn), lambda i, j: (0, j)),
            ],
            out_specs=pl.BlockSpec((tm, tn), lambda i, j: (i, j)),
            compiler_params=pltpu.CompilerParams(
                dimension_semantics=("parallel", "parallel"),
                vmem_limit_bytes=VMEM_LIMIT),
        )(x, w, b2)
    else:
        out = pl.pallas_call(
            functools.partial(_linear_kernel_acc, activation=activation),
            out_shape=jax.ShapeDtypeStruct((Mp, N), out_dtype),
            grid=(Mp // tm, N // tn, nk),
            in_specs=[
                pl.BlockSpec((tm, tk), lambda i, j, k: (i, k)),
                pl.BlockSpec((tk, tn), lambda i, j, k: (k, j)),
                pl.BlockSpec((1, tn), lambda i, j, k: (0, j)),
            ],
            out_specs=pl.BlockSpec((tm, tn), lambda i, j, k: (i, j)),
            scratch_shapes=[pltpu.VMEM((tm, tn), jnp.float32)],
            compiler_params=pltpu.CompilerParams(
                dimension_semantics=("parallel", "parallel", "arbitrary"),
                vmem_limit_bytes=VMEM_LIMIT),
        )(x, w, b2)
    return out[:M] if Mp != M else out


# ------------------ GEMM with fused residual-add + LayerNorm ---------------- #

def _res_ln_epilogue(y, r_ref, g_ref, bt_ref, o_ref, eps):
    y = y + r_ref[...].astype(jnp.float32)
    mean = jnp.mean(y, axis=-1, keepdims=True)
    var = jnp.mean((y - mean) ** 2, axis=-1, keepdims=True)
    y = (y - mean) * jax.lax.rsqrt(var + eps)
    y = y * g_ref[...].astype(jnp.float32) + bt_ref[...].astype(jnp.float32)
    o_ref[...] = y.astype(o_ref.dtype)


def _linear_res_ln_kernel_1k(x_ref, w_ref, b_ref, r_ref, g_ref, bt_ref, o_ref, *, eps):
    y = jnp.dot(x_ref[...], w_ref[...], preferred_element_type=jnp.float32)
    _res_ln_epilogue(y + b_ref[...].astype(jnp.float32), r_ref, g_ref, bt_ref, o_ref, eps)


def _linear_res_ln_kernel_acc(x_ref, w_ref, b_ref, r_ref, g_ref, bt_ref, o_ref, acc_ref, *, eps):
    @pl.when(pl.program_id(1) == 0)
    def _():
        acc_ref[...] = jnp.zeros_like(acc_ref)

    acc_ref[...] += jnp.dot(x_ref[...], w_ref[...], preferred_element_type=jnp.float32)

    @pl.when(pl.program_id(1) == pl.num_programs(1) - 1)
    def _():
        _res_ln_epilogue(acc_ref[...] + b_ref[...].astype(jnp.float32),
                         r_ref, g_ref, bt_ref, o_ref, eps)


def linear_residual_ln(x, w, b, residual, gamma, beta, eps=1e-12, out_dtype=jnp.bfloat16):
    """LayerNorm((x @ w + b) + residual); LN fused into the k-final GEMM epilogue (tn = N)."""
    M, K = x.shape
    K2, N = w.shape
    assert K == K2 and residual.shape == (M, N)

    tm, Mp = _pick_tile_pad(M, TM_TARGET)
    tk = _pick_tile(K, TK_TARGET)
    if Mp != M:
        pad = ((0, Mp - M), (0, 0))
        x = jnp.pad(x, pad)
        residual = jnp.pad(residual, pad)
    nk = K // tk
    args = (x, w, b.reshape(1, N), residual, gamma.reshape(1, N), beta.reshape(1, N))

    if nk == 1:
        grid = (Mp // tm,)
        in_specs = [
            pl.BlockSpec((tm, K), lambda i: (i, 0)),
            pl.BlockSpec((K, N), lambda i: (0, 0)),
            pl.BlockSpec((1, N), lambda i: (0, 0)),
            pl.BlockSpec((tm, N), lambda i: (i, 0)),
            pl.BlockSpec((1, N), lambda i: (0, 0)),
            pl.BlockSpec((1, N), lambda i: (0, 0)),
        ]
        out_specs = pl.BlockSpec((tm, N), lambda i: (i, 0))
        kernel = functools.partial(_linear_res_ln_kernel_1k, eps=eps)
        scratch = []
        sem = ("parallel",)
    else:
        grid = (Mp // tm, nk)
        in_specs = [
            pl.BlockSpec((tm, tk), lambda i, k: (i, k)),
            pl.BlockSpec((tk, N), lambda i, k: (k, 0)),
            pl.BlockSpec((1, N), lambda i, k: (0, 0)),
            pl.BlockSpec((tm, N), lambda i, k: (i, 0)),
            pl.BlockSpec((1, N), lambda i, k: (0, 0)),
            pl.BlockSpec((1, N), lambda i, k: (0, 0)),
        ]
        out_specs = pl.BlockSpec((tm, N), lambda i, k: (i, 0))
        kernel = functools.partial(_linear_res_ln_kernel_acc, eps=eps)
        scratch = [pltpu.VMEM((tm, N), jnp.float32)]
        sem = ("parallel", "arbitrary")

    out = pl.pallas_call(
        kernel,
        out_shape=jax.ShapeDtypeStruct((Mp, N), out_dtype),
        grid=grid,
        in_specs=in_specs,
        out_specs=out_specs,
        scratch_shapes=scratch,
        compiler_params=pltpu.CompilerParams(
            dimension_semantics=sem, vmem_limit_bytes=VMEM_LIMIT),
    )(*args)
    return out[:M] if Mp != M else out


# ------------------------------- LayerNorm ----------------------------------- #

def _ln_kernel(x_ref, g_ref, b_ref, o_ref, *, eps):
    x32 = x_ref[...].astype(jnp.float32)
    mean = jnp.mean(x32, axis=-1, keepdims=True)
    var = jnp.mean((x32 - mean) ** 2, axis=-1, keepdims=True)
    y = (x32 - mean) * jax.lax.rsqrt(var + eps)
    y = y * g_ref[...].astype(jnp.float32) + b_ref[...].astype(jnp.float32)
    o_ref[...] = y.astype(o_ref.dtype)


def layernorm(x, gamma, beta, eps=1e-12, out_dtype=jnp.bfloat16):
    M, H = x.shape
    tm, Mp = _pick_tile_pad(M, TM_TARGET)
    if Mp != M:
        x = jnp.pad(x, ((0, Mp - M), (0, 0)))
    out = pl.pallas_call(
        functools.partial(_ln_kernel, eps=eps),
        out_shape=jax.ShapeDtypeStruct((Mp, H), out_dtype),
        grid=(Mp // tm,),
        in_specs=[
            pl.BlockSpec((tm, H), lambda i: (i, 0)),
            pl.BlockSpec((1, H), lambda i: (0, 0)),
            pl.BlockSpec((1, H), lambda i: (0, 0)),
        ],
        out_specs=pl.BlockSpec((tm, H), lambda i: (i, 0)),
        compiler_params=pltpu.CompilerParams(
            dimension_semantics=("parallel",), vmem_limit_bytes=VMEM_LIMIT),
    )(x, gamma.reshape(1, H), beta.reshape(1, H))
    return out[:M] if Mp != M else out


# ------------------------------- Attention ----------------------------------- #

def _heads_per_block(n_heads, head_dim):
    """Smallest head group whose lane width (hp*D) is a 128 multiple; else all heads."""
    if head_dim % 128 == 0:
        return 1
    hp = 1
    while hp < n_heads and (hp * head_dim) % 128 != 0:
        hp += 1
    if (hp * head_dim) % 128 != 0 or n_heads % hp != 0:
        return n_heads
    return hp


def _mha_one_head(q, k, v, mask, scale):
    """One head: q,k,v [S,D] bf16, mask [1,S] f32 additive -> [S,D] f32."""
    # fold 1/sqrt(D) into q: S*D multiplies instead of S*S on the score matrix
    qs = (q.astype(jnp.float32) * scale).astype(q.dtype)
    # q @ k^T without materializing a transpose: contract on the last dims
    s = jax.lax.dot_general(qs, k, (((1,), (1,)), ((), ())),
                            preferred_element_type=jnp.float32) + mask      # [S,S] f32
    s = s - jnp.max(s, axis=-1, keepdims=True)
    p = jnp.exp(s)
    denom = jnp.sum(p, axis=-1, keepdims=True)                              # [S,1] f32
    # probabilities go to the MXU in bf16; normalization applied to the [S,D] output
    o = jnp.dot(p.astype(v.dtype), v, preferred_element_type=jnp.float32)   # [S,D] f32
    return o * pl.reciprocal(denom, approx=True)


def _attention_group_kernel(q_ref, k_ref, v_ref, m_ref, o_ref, *, hp, head_dim, scale):
    # q/k/v_ref, o_ref: [1, S, hp*D] bf16 (one lane-dense head group); m_ref: [1, 1, S] f32
    mask = m_ref[0]                               # [1,S], hoisted out of the head loop
    outs = []
    for i in range(hp):                           # hp == 2 at BERT scale (128-lane group)
        lo = i * head_dim
        outs.append(_mha_one_head(q_ref[0, :, lo:lo + head_dim],
                                  k_ref[0, :, lo:lo + head_dim],
                                  v_ref[0, :, lo:lo + head_dim], mask, scale))
    out = outs[0] if hp == 1 else jnp.concatenate(outs, axis=-1)
    o_ref[0] = out.astype(o_ref.dtype)            # one full-width lane-dense store


def _attention_full_kernel(qkv_ref, m_ref, o_ref, *, n_heads, head_dim, hidden, scale):
    # small-model fallback: qkv_ref [1, S, 3H], all heads in one step, full-width store
    mask = m_ref[0]
    outs = []
    for h in range(n_heads):
        lo = h * head_dim
        outs.append(_mha_one_head(
            qkv_ref[0, :, lo:lo + head_dim],
            qkv_ref[0, :, hidden + lo:hidden + lo + head_dim],
            qkv_ref[0, :, 2 * hidden + lo:2 * hidden + lo + head_dim],
            mask, scale))
    o_ref[0] = jnp.concatenate(outs, axis=-1).astype(o_ref.dtype)


def attention(qkv, add_mask, n_heads):
    """qkv: [B, S, 3H] fused Q|K|V (heads contiguous by D); add_mask: [B,1,S] additive.
    Returns [B, S, H]."""
    B, S, H3 = qkv.shape
    H = H3 // 3
    D = H // n_heads
    scale = 1.0 / (D ** 0.5)
    hp = _heads_per_block(n_heads, D)
    G = n_heads // hp
    blk = hp * D

    if blk % 128 == 0:
        # per-(batch, head-group) grid: heads live on a grid axis (bounded live ranges,
        # pipelined, B*G shardable units for v7x megacore); q/k/v are lane-aligned
        # 128-multiple column slabs of the same fused qkv array.
        nb = H // blk   # = G
        return pl.pallas_call(
            functools.partial(_attention_group_kernel, hp=hp, head_dim=D, scale=scale),
            out_shape=jax.ShapeDtypeStruct((B, S, H), qkv.dtype),
            grid=(B, G),
            in_specs=[
                pl.BlockSpec((1, S, blk), lambda b, g: (b, 0, g)),                      # q
                pl.BlockSpec((1, S, blk), lambda b, g, nb=nb: (b, 0, nb + g)),          # k
                pl.BlockSpec((1, S, blk), lambda b, g, nb=nb: (b, 0, 2 * nb + g)),      # v
                pl.BlockSpec((1, 1, S), lambda b, g: (b, 0, 0)),
            ],
            out_specs=pl.BlockSpec((1, S, blk), lambda b, g: (b, 0, g)),
            compiler_params=pltpu.CompilerParams(
                dimension_semantics=("parallel", "parallel"),
                vmem_limit_bytes=VMEM_LIMIT),
        )(qkv, qkv, qkv, add_mask)

    # small-model fallback (H < 128): full-width blocks keep the layout legal.
    return pl.pallas_call(
        functools.partial(_attention_full_kernel, n_heads=n_heads, head_dim=D,
                          hidden=H, scale=scale),
        out_shape=jax.ShapeDtypeStruct((B, S, H), qkv.dtype),
        grid=(B,),
        in_specs=[
            pl.BlockSpec((1, S, H3), lambda b: (b, 0, 0)),
            pl.BlockSpec((1, 1, S), lambda b: (b, 0, 0)),
        ],
        out_specs=pl.BlockSpec((1, S, H), lambda b: (b, 0, 0)),
        compiler_params=pltpu.CompilerParams(
            dimension_semantics=("parallel",),
            vmem_limit_bytes=VMEM_LIMIT),
    )(qkv, add_mask)


# --------------------------- Model (glue + params) --------------------------- #

def init_params(key, *, vocab, max_pos, hidden, n_heads, n_layers, intermediate):
    def nrm(k, shape, scale=0.02, dtype=jnp.bfloat16):
        return (scale * jax.random.normal(k, shape, dtype=jnp.float32)).astype(dtype)

    keys = jax.random.split(key, 16 + 8 * n_layers)
    ki = iter(keys)

    # classifier Linear(H, 1), padded to a lane-dense N=128 output (sliced after)
    cls_w = nrm(next(ki), (hidden, 1), dtype=jnp.float32)
    cls_w_pad = jnp.zeros((hidden, 128), jnp.float32).at[:, :1].set(cls_w)

    p = {
        "word_emb": nrm(next(ki), (vocab, hidden), dtype=jnp.float32),
        "pos_emb": nrm(next(ki), (max_pos, hidden), dtype=jnp.float32),
        "type_emb": nrm(next(ki), (2, hidden), dtype=jnp.float32),
        "emb_ln_g": jnp.ones((hidden,), jnp.float32),
        "emb_ln_b": jnp.zeros((hidden,), jnp.float32),
        "layers": [],
        "cls_w": cls_w_pad.astype(jnp.bfloat16),     # [H, 128] bf16
        "cls_b": jnp.zeros((128,), jnp.float32),
    }
    for _ in range(n_layers):
        layer = {
            # fused Q|K|V projection: one [H, 3H] weight (columns [q|k|v], heads by D)
            "w_qkv": nrm(next(ki), (hidden, 3 * hidden)),
            "b_qkv": jnp.zeros((3 * hidden,), jnp.float32),
            "wo": nrm(next(ki), (hidden, hidden)),
            "bo": jnp.zeros((hidden,), jnp.float32),
            "ln1_g": jnp.ones((hidden,), jnp.float32),
            "ln1_b": jnp.zeros((hidden,), jnp.float32),
            "w1": nrm(next(ki), (hidden, intermediate)),
            "b1": jnp.zeros((intermediate,), jnp.float32),
            "w2": nrm(next(ki), (intermediate, hidden)),
            "b2": jnp.zeros((hidden,), jnp.float32),
            "ln2_g": jnp.ones((hidden,), jnp.float32),
            "ln2_b": jnp.zeros((hidden,), jnp.float32),
        }
        p["layers"].append(layer)
    return p


def encoder_layer(x2, add_mask, lp, *, B, S, H, n_heads):
    # x2: [B*S, H] bf16
    qkv = linear(x2, lp["w_qkv"], lp["b_qkv"])                        # [B*S, 3H] fused QKV
    ctx = attention(qkv.reshape(B, S, 3 * H), add_mask, n_heads)      # [B, S, H]
    # attention-output projection with residual-add + LayerNorm fused into the GEMM epilogue
    x2 = linear_residual_ln(ctx.reshape(B * S, H), lp["wo"], lp["bo"],
                            residual=x2, gamma=lp["ln1_g"], beta=lp["ln1_b"])
    h = linear(x2, lp["w1"], lp["b1"], activation="gelu")             # [B*S, 4H]
    # FFN-down projection with residual-add + LayerNorm fused into the GEMM epilogue
    x2 = linear_residual_ln(h, lp["w2"], lp["b2"],
                            residual=x2, gamma=lp["ln2_g"], beta=lp["ln2_b"])
    return x2


def text_forward(params, token_ids, attention_mask, *, n_heads):
    """Equivalent of text.forward(text, attention) with textModel == 1, eval mode."""
    B, S = token_ids.shape
    H = params["word_emb"].shape[1]

    # Embeddings (gathers are plain-JAX glue; normalization runs in a Pallas kernel).
    x = (params["word_emb"][token_ids]
         + params["pos_emb"][:S][None, :, :]
         + params["type_emb"][0][None, None, :])                       # f32 [B, S, H]
    x2 = layernorm(x.reshape(B * S, H), params["emb_ln_g"], params["emb_ln_b"])  # -> bf16

    # BERT-style extended attention mask, f32 additive on the key axis.
    add_mask = ((1.0 - attention_mask.astype(jnp.float32)) * -1e9).reshape(B, 1, S)

    for lp in params["layers"]:
        x2 = encoder_layer(x2, add_mask, lp, B=B, S=S, H=H, n_heads=n_heads)

    cls = x2.reshape(B, S, H)[:, 0, :]                                 # textOut[:, 0, :]
    # TODO(synk): nn.Dropout(0.2) is identity at inference; training-mode dropout not modeled.
    out = linear(cls, params["cls_w"], params["cls_b"], out_dtype=jnp.float32)[:, :1]
    return out                                                          # [B, 1] f32


# ---------------------------------- Main ------------------------------------- #

if __name__ == "__main__":
    B, S = 2, 8                 # batch, sequence length (small stand-in for maxSeqLen=512)
    hidden, n_heads = 32, 4     # small stand-in for BERT-base hidden=768, heads=12
    n_layers, intermediate = 2, 64
    vocab, max_pos = 64, 16

    key = jax.random.PRNGKey(0)
    kp, kt = jax.random.split(key)

    params = init_params(kp, vocab=vocab, max_pos=max_pos, hidden=hidden,
                         n_heads=n_heads, n_layers=n_layers, intermediate=intermediate)

    token_ids = jax.random.randint(kt, (B, S), 0, vocab, dtype=jnp.int32)
    attention_mask = jnp.concatenate(
        [jnp.ones((B, S - 2), jnp.float32), jnp.zeros((B, 2), jnp.float32)], axis=1)

    fwd = jax.jit(functools.partial(text_forward, n_heads=n_heads))
    out = fwd(params, token_ids, attention_mask)
    jax.block_until_ready(out)

    assert out.shape == (B, 1), out.shape
    assert bool(jnp.all(jnp.isfinite(out))), "non-finite output"
    print("KERNEL_OK")
</pallas_src>

<mosaic_0001>
module attributes {stable_mosaic.version = 11 : i64} {
  func.func @_linear_kernel_1k(%arg0: i32, %arg1: i32, %arg2: memref<16x32xbf16, #tpu.memory_space<vmem>>, %arg3: memref<32x96xbf16, #tpu.memory_space<vmem>>, %arg4: memref<1x96xf32, #tpu.memory_space<vmem>>, %arg5: memref<16x96xbf16, #tpu.memory_space<vmem>>) attributes {dimension_semantics = [#tpu.dimension_semantics<parallel>, #tpu.dimension_semantics<parallel>], iteration_bounds = array<i64: 1, 1>, scalar_prefetch = 0 : i64, scratch_operands = 0 : i64, tpu.core_type = #tpu.core_type<tc>, window_params = [{transform_indices = @transform_0, window_bounds = array<i64: 16, 32>}, {transform_indices = @transform_1, window_bounds = array<i64: 32, 96>}, {transform_indices = @transform_2, window_bounds = array<i64: 1, 96>}, {transform_indices = @transform_3, window_bounds = array<i64: 16, 96>}]} {
    %c0 = arith.constant 0 : index
    %c0_0 = arith.constant 0 : index
    %0 = vector.load %arg2[%c0, %c0_0] : memref<16x32xbf16, #tpu.memory_space<vmem>>, vector<16x32xbf16>
    %c0_1 = arith.constant 0 : index
    %c0_2 = arith.constant 0 : index
    %1 = vector.load %arg3[%c0_1, %c0_2] : memref<32x96xbf16, #tpu.memory_space<vmem>>, vector<32x96xbf16>
    %cst = arith.constant dense<0.000000e+00> : vector<16x96xf32>
    %2 = tpu.matmul %0, %1, %cst {dimension_numbers = #tpu.dot_dimension_numbers<[1], [0], [0], [1], [0, 0, 1, 1], [], []>} : vector<16x32xbf16>, vector<32x96xbf16>, vector<16x96xf32> -> vector<16x96xf32>
    %c0_3 = arith.constant 0 : index
    %c0_4 = arith.constant 0 : index
    %3 = vector.load %arg4[%c0_3, %c0_4] : memref<1x96xf32, #tpu.memory_space<vmem>>, vector<1x96xf32>
    %4 = vector.broadcast %3 : vector<1x96xf32> to vector<16x96xf32>
    %5 = arith.addf %2, %4 : vector<16x96xf32>
    %6 = arith.truncf %5 : vector<16x96xf32> to vector<16x96xbf16>
    %c0_5 = arith.constant 0 : index
    %c0_6 = arith.constant 0 : index
    %7 = vector.load %arg5[%c0_5, %c0_6] : memref<16x96xbf16, #tpu.memory_space<vmem>>, vector<16x96xbf16>
    tpu.vector_store %arg5[%c0_5, %c0_6], %6 {strides = array<i32>} : memref<16x96xbf16, #tpu.memory_space<vmem>>, vector<16x96xbf16>,
    return
  }
  func.func @transform_0(%arg0: i32, %arg1: i32) -> (i32, i32) {
    %c0_i32 = arith.constant 0 : i32
    %c0_i32_0 = arith.constant 0 : i32
    return %arg0, %c0_i32 : i32, i32
  }
  func.func @transform_1(%arg0: i32, %arg1: i32) -> (i32, i32) {
    %c0_i32 = arith.constant 0 : i32
    %c0_i32_0 = arith.constant 0 : i32
    return %c0_i32, %arg1 : i32, i32
  }
  func.func @transform_2(%arg0: i32, %arg1: i32) -> (i32, i32) {
    %c0_i32 = arith.constant 0 : i32
    %c0_i32_0 = arith.constant 0 : i32
    return %c0_i32, %arg1 : i32, i32
  }
  func.func @transform_3(%arg0: i32, %arg1: i32) -> (i32, i32) {
    %c0_i32 = arith.constant 0 : i32
    return %arg0, %arg1 : i32, i32
  }
}

module attributes {stable_mosaic.version = 11 : i64} {
  func.func @_ln_kernel(%arg0: i32, %arg1: memref<16x32xf32, #tpu.memory_space<vmem>>, %arg2: memref<1x32xf32, #tpu.memory_space<vmem>>, %arg3: memref<1x32xf32, #tpu.memory_space<vmem>>, %arg4: memref<16x32xbf16, #tpu.memory_space<vmem>>) attributes {dimension_semantics = [#tpu.dimension_semantics<parallel>], iteration_bounds = array<i64: 1>, scalar_prefetch = 0 : i64, scratch_operands = 0 : i64, tpu.core_type = #tpu.core_type<tc>, window_params = [{transform_indices = @transform_0, window_bounds = array<i64: 16, 32>}, {pipeline_mode = #tpu.pipeline_mode<synchronous>, transform_indices = @transform_1, window_bounds = array<i64: 1, 32>}, {pipeline_mode = #tpu.pipeline_mode<synchronous>, transform_indices = @transform_2, window_bounds = array<i64: 1, 32>}, {transform_indices = @transform_3, window_bounds = array<i64: 16, 32>}]} {
    %c0 = arith.constant 0 : index
    %c0_0 = arith.constant 0 : index
    %0 = vector.load %arg1[%c0, %c0_0] : memref<16x32xf32, #tpu.memory_space<vmem>>, vector<16x32xf32>
    %cst = arith.constant dense<0.000000e+00> : vector<16xf32>
    %1 = vector.multi_reduction <add>, %0, %cst [1] : vector<16x32xf32> to vector<16xf32>
    %2 = vector.shape_cast %1 : vector<16xf32> to vector<16x1xf32>
    %cst_1 = arith.constant 3.200000e+01 : f32
    %3 = vector.broadcast %cst_1 : f32 to vector<16x1xf32>
    %4 = arith.divf %2, %3 : vector<16x1xf32>
    %5 = vector.broadcast %4 : vector<16x1xf32> to vector<16x32xf32>
    %6 = arith.subf %0, %5 : vector<16x32xf32>
    %7 = arith.mulf %6, %6 : vector<16x32xf32>
    %cst_2 = arith.constant dense<0.000000e+00> : vector<16xf32>
    %8 = vector.multi_reduction <add>, %7, %cst_2 [1] : vector<16x32xf32> to vector<16xf32>
    %9 = vector.shape_cast %8 : vector<16xf32> to vector<16x1xf32>
    %cst_3 = arith.constant 3.200000e+01 : f32
    %10 = vector.broadcast %cst_3 : f32 to vector<16x1xf32>
    %11 = arith.divf %9, %10 : vector<16x1xf32>
    %12 = vector.broadcast %4 : vector<16x1xf32> to vector<16x32xf32>
    %13 = arith.subf %0, %12 : vector<16x32xf32>
    %cst_4 = arith.constant 9.99999996E-13 : f32
    %14 = vector.broadcast %cst_4 : f32 to vector<16x1xf32>
    %15 = arith.addf %11, %14 : vector<16x1xf32>
    %16 = math.rsqrt %15 : vector<16x1xf32>
    %17 = vector.broadcast %16 : vector<16x1xf32> to vector<16x32xf32>
    %18 = arith.mulf %13, %17 : vector<16x32xf32>
    %c0_5 = arith.constant 0 : index
    %c0_6 = arith.constant 0 : index
    %19 = vector.load %arg2[%c0_5, %c0_6] : memref<1x32xf32, #tpu.memory_space<vmem>>, vector<1x32xf32>
    %20 = vector.broadcast %19 : vector<1x32xf32> to vector<16x32xf32>
    %21 = arith.mulf %18, %20 : vector<16x32xf32>
    %c0_7 = arith.constant 0 : index
    %c0_8 = arith.constant 0 : index
    %22 = vector.load %arg3[%c0_7, %c0_8] : memref<1x32xf32, #tpu.memory_space<vmem>>, vector<1x32xf32>
    %23 = vector.broadcast %22 : vector<1x32xf32> to vector<16x32xf32>
    %24 = arith.addf %21, %23 : vector<16x32xf32>
    %25 = arith.truncf %24 : vector<16x32xf32> to vector<16x32xbf16>
    %c0_9 = arith.constant 0 : index
    %c0_10 = arith.constant 0 : index
    %26 = vector.load %arg4[%c0_9, %c0_10] : memref<16x32xbf16, #tpu.memory_space<vmem>>, vector<16x32xbf16>
    tpu.vector_store %arg4[%c0_9, %c0_10], %25 {strides = array<i32>} : memref<16x32xbf16, #tpu.memory_space<vmem>>, vector<16x32xbf16>,
    return
  }
  func.func @transform_0(%arg0: i32) -> (i32, i32) {
    %c0_i32 = arith.constant 0 : i32
    %c0_i32_0 = arith.constant 0 : i32
    return %arg0, %c0_i32 : i32, i32
  }
  func.func @transform_1(%arg0: i32) -> (i32, i32) {
    %c0_i32 = arith.constant 0 : i32
    %c0_i32_0 = arith.constant 0 : i32
    %c0_i32_1 = arith.constant 0 : i32
    return %c0_i32, %c0_i32_0 : i32, i32
  }
  func.func @transform_2(%arg0: i32) -> (i32, i32) {
    %c0_i32 = arith.constant 0 : i32
    %c0_i32_0 = arith.constant 0 : i32
    %c0_i32_1 = arith.constant 0 : i32
    return %c0_i32, %c0_i32_0 : i32, i32
  }
  func.func @transform_3(%arg0: i32) -> (i32, i32) {
    %c0_i32 = arith.constant 0 : i32
    %c0_i32_0 = arith.constant 0 : i32
    return %arg0, %c0_i32 : i32, i32
  }
}

module attributes {stable_mosaic.version = 11 : i64} {
  func.func @_linear_res_ln_kernel_1k(%arg0: i32, %arg1: memref<16x32xbf16, #tpu.memory_space<vmem>>, %arg2: memref<32x32xbf16, #tpu.memory_space<vmem>>, %arg3: memref<1x32xf32, #tpu.memory_space<vmem>>, %arg4: memref<16x32xbf16, #tpu.memory_space<vmem>>, %arg5: memref<1x32xf32, #tpu.memory_space<vmem>>, %arg6: memref<1x32xf32, #tpu.memory_space<vmem>>, %arg7: memref<16x32xbf16, #tpu.memory_space<vmem>>) attributes {dimension_semantics = [#tpu.dimension_semantics<parallel>], iteration_bounds = array<i64: 1>, scalar_prefetch = 0 : i64, scratch_operands = 0 : i64, tpu.core_type = #tpu.core_type<tc>, window_params = [{transform_indices = @transform_0, window_bounds = array<i64: 16, 32>}, {pipeline_mode = #tpu.pipeline_mode<synchronous>, transform_indices = @transform_1, window_bounds = array<i64: 32, 32>}, {pipeline_mode = #tpu.pipeline_mode<synchronous>, transform_indices = @transform_2, window_bounds = array<i64: 1, 32>}, {transform_indices = @transform_3, window_bounds = array<i64: 16, 32>}, {pipeline_mode = #tpu.pipeline_mode<synchronous>, transform_indices = @transform_4, window_bounds = array<i64: 1, 32>}, {pipeline_mode = #tpu.pipeline_mode<synchronous>, transform_indices = @transform_5, window_bounds = array<i64: 1, 32>}, {transform_indices = @transform_6, window_bounds = array<i64: 16, 32>}]} {
    %c0 = arith.constant 0 : index
    %c0_0 = arith.constant 0 : index
    %0 = vector.load %arg1[%c0, %c0_0] : memref<16x32xbf16, #tpu.memory_space<vmem>>, vector<16x32xbf16>
    %c0_1 = arith.constant 0 : index
    %c0_2 = arith.constant 0 : index
    %1 = vector.load %arg2[%c0_1, %c0_2] : memref<32x32xbf16, #tpu.memory_space<vmem>>, vector<32x32xbf16>
    %cst = arith.constant dense<0.000000e+00> : vector<16x32xf32>
    %2 = tpu.matmul %0, %1, %cst {dimension_numbers = #tpu.dot_dimension_numbers<[1], [0], [0], [1], [0, 0, 1, 1], [], []>} : vector<16x32xbf16>, vector<32x32xbf16>, vector<16x32xf32> -> vector<16x32xf32>
    %c0_3 = arith.constant 0 : index
    %c0_4 = arith.constant 0 : index
    %3 = vector.load %arg3[%c0_3, %c0_4] : memref<1x32xf32, #tpu.memory_space<vmem>>, vector<1x32xf32>
    %4 = vector.broadcast %3 : vector<1x32xf32> to vector<16x32xf32>
    %5 = arith.addf %2, %4 : vector<16x32xf32>
    %c0_5 = arith.constant 0 : index
    %c0_6 = arith.constant 0 : index
    %6 = vector.load %arg4[%c0_5, %c0_6] : memref<16x32xbf16, #tpu.memory_space<vmem>>, vector<16x32xbf16>
    %7 = arith.extf %6 : vector<16x32xbf16> to vector<16x32xf32>
    %8 = arith.addf %5, %7 : vector<16x32xf32>
    %cst_7 = arith.constant dense<0.000000e+00> : vector<16xf32>
    %9 = vector.multi_reduction <add>, %8, %cst_7 [1] : vector<16x32xf32> to vector<16xf32>
    %10 = vector.shape_cast %9 : vector<16xf32> to vector<16x1xf32>
    %cst_8 = arith.constant 3.200000e+01 : f32
    %11 = vector.broadcast %cst_8 : f32 to vector<16x1xf32>
    %12 = arith.divf %10, %11 : vector<16x1xf32>
    %13 = vector.broadcast %12 : vector<16x1xf32> to vector<16x32xf32>
    %14 = arith.subf %8, %13 : vector<16x32xf32>
    %15 = arith.mulf %14, %14 : vector<16x32xf32>
    %cst_9 = arith.constant dense<0.000000e+00> : vector<16xf32>
    %16 = vector.multi_reduction <add>, %15, %cst_9 [1] : vector<16x32xf32> to vector<16xf32>
    %17 = vector.shape_cast %16 : vector<16xf32> to vector<16x1xf32>
    %cst_10 = arith.constant 3.200000e+01 : f32
    %18 = vector.broadcast %cst_10 : f32 to vector<16x1xf32>
    %19 = arith.divf %17, %18 : vector<16x1xf32>
    %20 = vector.broadcast %12 : vector<16x1xf32> to vector<16x32xf32>
    %21 = arith.subf %8, %20 : vector<16x32xf32>
    %cst_11 = arith.constant 9.99999996E-13 : f32
    %22 = vector.broadcast %cst_11 : f32 to vector<16x1xf32>
    %23 = arith.addf %19, %22 : vector<16x1xf32>
    %24 = math.rsqrt %23 : vector<16x1xf32>
    %25 = vector.broadcast %24 : vector<16x1xf32> to vector<16x32xf32>
    %26 = arith.mulf %21, %25 : vector<16x32xf32>
    %c0_12 = arith.constant 0 : index
    %c0_13 = arith.constant 0 : index
    %27 = vector.load %arg5[%c0_12, %c0_13] : memref<1x32xf32, #tpu.memory_space<vmem>>, vector<1x32xf32>
    %28 = vector.broadcast %27 : vector<1x32xf32> to vector<16x32xf32>
    %29 = arith.mulf %26, %28 : vector<16x32xf32>
    %c0_14 = arith.constant 0 : index
    %c0_15 = arith.constant 0 : index
    %30 = vector.load %arg6[%c0_14, %c0_15] : memref<1x32xf32, #tpu.memory_space<vmem>>, vector<1x32xf32>
    %31 = vector.broadcast %30 : vector<1x32xf32> to vector<16x32xf32>
    %32 = arith.addf %29, %31 : vector<16x32xf32>
    %33 = arith.truncf %32 : vector<16x32xf32> to vector<16x32xbf16>
    %c0_16 = arith.constant 0 : index
    %c0_17 = arith.constant 0 : index
    %34 = vector.load %arg7[%c0_16, %c0_17] : memref<16x32xbf16, #tpu.memory_space<vmem>>, vector<16x32xbf16>
    tpu.vector_store %arg7[%c0_16, %c0_17], %33 {strides = array<i32>} : memref<16x32xbf16, #tpu.memory_space<vmem>>, vector<16x32xbf16>,
    return
  }
  func.func @transform_0(%arg0: i32) -> (i32, i32) {
    %c0_i32 = arith.constant 0 : i32
    %c0_i32_0 = arith.constant 0 : i32
    return %arg0, %c0_i32 : i32, i32
  }
  func.func @transform_1(%arg0: i32) -> (i32, i32) {
    %c0_i32 = arith.constant 0 : i32
    %c0_i32_0 = arith.constant 0 : i32
    %c0_i32_1 = arith.constant 0 : i32
    return %c0_i32, %c0_i32_0 : i32, i32
  }
  func.func @transform_2(%arg0: i32) -> (i32, i32) {
    %c0_i32 = arith.constant 0 : i32
    %c0_i32_0 = arith.constant 0 : i32
    %c0_i32_1 = arith.constant 0 : i32
    return %c0_i32, %c0_i32_0 : i32, i32
  }
  func.func @transform_3(%arg0: i32) -> (i32, i32) {
    %c0_i32 = arith.constant 0 : i32
    %c0_i32_0 = arith.constant 0 : i32
    return %arg0, %c0_i32 : i32, i32
  }
  func.func @transform_4(%arg0: i32) -> (i32, i32) {
    %c0_i32 = arith.constant 0 : i32
    %c0_i32_0 = arith.constant 0 : i32
    %c0_i32_1 = arith.constant 0 : i32
    return %c0_i32, %c0_i32_0 : i32, i32
  }
  func.func @transform_5(%arg0: i32) -> (i32, i32) {
    %c0_i32 = arith.constant 0 : i32
    %c0_i32_0 = arith.constant 0 : i32
    %c0_i32_1 = arith.constant 0 : i32
    return %c0_i32, %c0_i32_0 : i32, i32
  }
  func.func @transform_6(%arg0: i32) -> (i32, i32) {
    %c0_i32 = arith.constant 0 : i32
    %c0_i32_0 = arith.constant 0 : i32
    return %arg0, %c0_i32 : i32, i32
  }
}

module attributes {stable_mosaic.version = 11 : i64} {
  func.func @_attention_full_kernel(%arg0: i32, %arg1: memref<1x8x96xbf16, #tpu.memory_space<vmem>>, %arg2: memref<1x1x8xf32, #tpu.memory_space<vmem>>, %arg3: memref<1x8x32xbf16, #tpu.memory_space<vmem>>) attributes {dimension_semantics = [#tpu.dimension_semantics<parallel>], iteration_bounds = array<i64: 2>, scalar_prefetch = 0 : i64, scratch_operands = 0 : i64, tpu.core_type = #tpu.core_type<tc>, window_params = [{transform_indices = @transform_0, window_bounds = array<i64: 1, 8, 96>}, {transform_indices = @transform_1, window_bounds = array<i64: 1, 1, 8>}, {transform_indices = @transform_2, window_bounds = array<i64: 1, 8, 32>}]} {
    %c0 = arith.constant 0 : index
    %c0_0 = arith.constant 0 : index
    %c0_1 = arith.constant 0 : index
    %0 = vector.load %arg2[%c0, %c0_0, %c0_1] : memref<1x1x8xf32, #tpu.memory_space<vmem>>, vector<1x1x8xf32>
    %1 = vector.shape_cast %0 : vector<1x1x8xf32> to vector<1x8xf32>
    %c0_2 = arith.constant 0 : index
    %c0_3 = arith.constant 0 : index
    %c0_4 = arith.constant 0 : index
    %2 = vector.load %arg1[%c0_2, %c0_3, %c0_4] : memref<1x8x96xbf16, #tpu.memory_space<vmem>>, vector<1x8x8xbf16>
    %3 = vector.shape_cast %2 : vector<1x8x8xbf16> to vector<8x8xbf16>
    %c0_5 = arith.constant 0 : index
    %c0_6 = arith.constant 0 : index
    %c32 = arith.constant 32 : index
    %4 = vector.load %arg1[%c0_5, %c0_6, %c32] : memref<1x8x96xbf16, #tpu.memory_space<vmem>>, vector<1x8x8xbf16>
    %5 = vector.shape_cast %4 : vector<1x8x8xbf16> to vector<8x8xbf16>
    %c0_7 = arith.constant 0 : index
    %c0_8 = arith.constant 0 : index
    %c64 = arith.constant 64 : index
    %6 = vector.load %arg1[%c0_7, %c0_8, %c64] : memref<1x8x96xbf16, #tpu.memory_space<vmem>>, vector<1x8x8xbf16>
    %7 = vector.shape_cast %6 : vector<1x8x8xbf16> to vector<8x8xbf16>
    %8 = arith.extf %3 : vector<8x8xbf16> to vector<8x8xf32>
    %cst = arith.constant 0.353553385 : f32
    %9 = vector.broadcast %cst : f32 to vector<8x8xf32>
    %10 = arith.mulf %8, %9 : vector<8x8xf32>
    %11 = arith.truncf %10 : vector<8x8xf32> to vector<8x8xbf16>
    %cst_9 = arith.constant dense<0.000000e+00> : vector<8x8xf32>
    %12 = tpu.matmul %11, %5, %cst_9 {dimension_numbers = #tpu.dot_dimension_numbers<[1], [1], [0], [0], [0, 0, 1, 0], [], []>} : vector<8x8xbf16>, vector<8x8xbf16>, vector<8x8xf32> -> vector<8x8xf32>
    %13 = vector.broadcast %1 : vector<1x8xf32> to vector<8x8xf32>
    %14 = arith.addf %12, %13 : vector<8x8xf32>
    %cst_10 = arith.constant dense<0xFF800000> : vector<8xf32>
    %15 = vector.multi_reduction <maximumf>, %14, %cst_10 [1] : vector<8x8xf32> to vector<8xf32>
    %16 = vector.shape_cast %15 : vector<8xf32> to vector<8x1xf32>
    %17 = vector.broadcast %16 : vector<8x1xf32> to vector<8x8xf32>
    %18 = arith.subf %14, %17 : vector<8x8xf32>
    %19 = math.exp %18 : vector<8x8xf32>
    %cst_11 = arith.constant dense<0.000000e+00> : vector<8xf32>
    %20 = vector.multi_reduction <add>, %19, %cst_11 [1] : vector<8x8xf32> to vector<8xf32>
    %21 = vector.shape_cast %20 : vector<8xf32> to vector<8x1xf32>
    %22 = arith.truncf %19 : vector<8x8xf32> to vector<8x8xbf16>
    %cst_12 = arith.constant dense<0.000000e+00> : vector<8x8xf32>
    %23 = tpu.matmul %22, %7, %cst_12 {dimension_numbers = #tpu.dot_dimension_numbers<[1], [0], [0], [1], [0, 0, 1, 1], [], []>} : vector<8x8xbf16>, vector<8x8xbf16>, vector<8x8xf32> -> vector<8x8xf32>
    %24 = tpu.reciprocal %21 {approx = true} : vector<8x1xf32> -> vector<8x1xf32>
    %25 = vector.broadcast %24 : vector<8x1xf32> to vector<8x8xf32>
    %26 = arith.mulf %23, %25 : vector<8x8xf32>
    %c0_13 = arith.constant 0 : index
    %c0_14 = arith.constant 0 : index
    %c8 = arith.constant 8 : index
    %27 = vector.load %arg1[%c0_13, %c0_14, %c8] : memref<1x8x96xbf16, #tpu.memory_space<vmem>>, vector<1x8x8xbf16>
    %28 = vector.shape_cast %27 : vector<1x8x8xbf16> to vector<8x8xbf16>
    %c0_15 = arith.constant 0 : index
    %c0_16 = arith.constant 0 : index
    %c40 = arith.constant 40 : index
    %29 = vector.load %arg1[%c0_15, %c0_16, %c40] : memref<1x8x96xbf16, #tpu.memory_space<vmem>>, vector<1x8x8xbf16>
    %30 = vector.shape_cast %29 : vector<1x8x8xbf16> to vector<8x8xbf16>
    %c0_17 = arith.constant 0 : index
    %c0_18 = arith.constant 0 : index
    %c72 = arith.constant 72 : index
    %31 = vector.load %arg1[%c0_17, %c0_18, %c72] : memref<1x8x96xbf16, #tpu.memory_space<vmem>>, vector<1x8x8xbf16>
    %32 = vector.shape_cast %31 : vector<1x8x8xbf16> to vector<8x8xbf16>
    %33 = arith.extf %28 : vector<8x8xbf16> to vector<8x8xf32>
    %cst_19 = arith.constant 0.353553385 : f32
    %34 = vector.broadcast %cst_19 : f32 to vector<8x8xf32>
    %35 = arith.mulf %33, %34 : vector<8x8xf32>
    %36 = arith.truncf %35 : vector<8x8xf32> to vector<8x8xbf16>
    %cst_20 = arith.constant dense<0.000000e+00> : vector<8x8xf32>
    %37 = tpu.matmul %36, %30, %cst_20 {dimension_numbers = #tpu.dot_dimension_numbers<[1], [1], [0], [0], [0, 0, 1, 0], [], []>} : vector<8x8xbf16>, vector<8x8xbf16>, vector<8x8xf32> -> vector<8x8xf32>
    %38 = vector.broadcast %1 : vector<1x8xf32> to vector<8x8xf32>
    %39 = arith.addf %37, %38 : vector<8x8xf32>
    %cst_21 = arith.constant dense<0xFF800000> : vector<8xf32>
    %40 = vector.multi_reduction <maximumf>, %39, %cst_21 [1] : vector<8x8xf32> to vector<8xf32>
    %41 = vector.shape_cast %40 : vector<8xf32> to vector<8x1xf32>
    %42 = vector.broadcast %41 : vector<8x1xf32> to vector<8x8xf32>
    %43 = arith.subf %39, %42 : vector<8x8xf32>
    %44 = math.exp %43 : vector<8x8xf32>
    %cst_22 = arith.constant dense<0.000000e+00> : vector<8xf32>
    %45 = vector.multi_reduction <add>, %44, %cst_22 [1] : vector<8x8xf32> to vector<8xf32>
    %46 = vector.shape_cast %45 : vector<8xf32> to vector<8x1xf32>
    %47 = arith.truncf %44 : vector<8x8xf32> to vector<8x8xbf16>
    %cst_23 = arith.constant dense<0.000000e+00> : vector<8x8xf32>
    %48 = tpu.matmul %47, %32, %cst_23 {dimension_numbers = #tpu.dot_dimension_numbers<[1], [0], [0], [1], [0, 0, 1, 1], [], []>} : vector<8x8xbf16>, vector<8x8xbf16>, vector<8x8xf32> -> vector<8x8xf32>
    %49 = tpu.reciprocal %46 {approx = true} : vector<8x1xf32> -> vector<8x1xf32>
    %50 = vector.broadcast %49 : vector<8x1xf32> to vector<8x8xf32>
    %51 = arith.mulf %48, %50 : vector<8x8xf32>
    %c0_24 = arith.constant 0 : index
    %c0_25 = arith.constant 0 : index
    %c16 = arith.constant 16 : index
    %52 = vector.load %arg1[%c0_24, %c0_25, %c16] : memref<1x8x96xbf16, #tpu.memory_space<vmem>>, vector<1x8x8xbf16>
    %53 = vector.shape_cast %52 : vector<1x8x8xbf16> to vector<8x8xbf16>
    %c0_26 = arith.constant 0 : index
    %c0_27 = arith.constant 0 : index
    %c48 = arith.constant 48 : index
    %54 = vector.load %arg1[%c0_26, %c0_27, %c48] : memref<1x8x96xbf16, #tpu.memory_space<vmem>>, vector<1x8x8xbf16>
    %55 = vector.shape_cast %54 : vector<1x8x8xbf16> to vector<8x8xbf16>
    %c0_28 = arith.constant 0 : index
    %c0_29 = arith.constant 0 : index
    %c80 = arith.constant 80 : index
    %56 = vector.load %arg1[%c0_28, %c0_29, %c80] : memref<1x8x96xbf16, #tpu.memory_space<vmem>>, vector<1x8x8xbf16>
    %57 = vector.shape_cast %56 : vector<1x8x8xbf16> to vector<8x8xbf16>
    %58 = arith.extf %53 : vector<8x8xbf16> to vector<8x8xf32>
    %cst_30 = arith.constant 0.353553385 : f32
    %59 = vector.broadcast %cst_30 : f32 to vector<8x8xf32>
    %60 = arith.mulf %58, %59 : vector<8x8xf32>
    %61 = arith.truncf %60 : vector<8x8xf32> to vector<8x8xbf16>
    %cst_31 = arith.constant dense<0.000000e+00> : vector<8x8xf32>
    %62 = tpu.matmul %61, %55, %cst_31 {dimension_numbers = #tpu.dot_dimension_numbers<[1], [1], [0], [0], [0, 0, 1, 0], [], []>} : vector<8x8xbf16>, vector<8x8xbf16>, vector<8x8xf32> -> vector<8x8xf32>
    %63 = vector.broadcast %1 : vector<1x8xf32> to vector<8x8xf32>
    %64 = arith.addf %62, %63 : vector<8x8xf32>
    %cst_32 = arith.constant dense<0xFF800000> : vector<8xf32>
    %65 = vector.multi_reduction <maximumf>, %64, %cst_32 [1] : vector<8x8xf32> to vector<8xf32>
    %66 = vector.shape_cast %65 : vector<8xf32> to vector<8x1xf32>
    %67 = vector.broadcast %66 : vector<8x1xf32> to vector<8x8xf32>
    %68 = arith.subf %64, %67 : vector<8x8xf32>
    %69 = math.exp %68 : vector<8x8xf32>
    %cst_33 = arith.constant dense<0.000000e+00> : vector<8xf32>
    %70 = vector.multi_reduction <add>, %69, %cst_33 [1] : vector<8x8xf32> to vector<8xf32>
    %71 = vector.shape_cast %70 : vector<8xf32> to vector<8x1xf32>
    %72 = arith.truncf %69 : vector<8x8xf32> to vector<8x8xbf16>
    %cst_34 = arith.constant dense<0.000000e+00> : vector<8x8xf32>
    %73 = tpu.matmul %72, %57, %cst_34 {dimension_numbers = #tpu.dot_dimension_numbers<[1], [0], [0], [1], [0, 0, 1, 1], [], []>} : vector<8x8xbf16>, vector<8x8xbf16>, vector<8x8xf32> -> vector<8x8xf32>
    %74 = tpu.reciprocal %71 {approx = true} : vector<8x1xf32> -> vector<8x1xf32>
    %75 = vector.broadcast %74 : vector<8x1xf32> to vector<8x8xf32>
    %76 = arith.mulf %73, %75 : vector<8x8xf32>
    %c0_35 = arith.constant 0 : index
    %c0_36 = arith.constant 0 : index
    %c24 = arith.constant 24 : index
    %77 = vector.load %arg1[%c0_35, %c0_36, %c24] : memref<1x8x96xbf16, #tpu.memory_space<vmem>>, vector<1x8x8xbf16>
    %78 = vector.shape_cast %77 : vector<1x8x8xbf16> to vector<8x8xbf16>
    %c0_37 = arith.constant 0 : index
    %c0_38 = arith.constant 0 : index
    %c56 = arith.constant 56 : index
    %79 = vector.load %arg1[%c0_37, %c0_38, %c56] : memref<1x8x96xbf16, #tpu.memory_space<vmem>>, vector<1x8x8xbf16>
    %80 = vector.shape_cast %79 : vector<1x8x8xbf16> to vector<8x8xbf16>
    %c0_39 = arith.constant 0 : index
    %c0_40 = arith.constant 0 : index
    %c88 = arith.constant 88 : index
    %81 = vector.load %arg1[%c0_39, %c0_40, %c88] : memref<1x8x96xbf16, #tpu.memory_space<vmem>>, vector<1x8x8xbf16>
    %82 = vector.shape_cast %81 : vector<1x8x8xbf16> to vector<8x8xbf16>
    %83 = arith.extf %78 : vector<8x8xbf16> to vector<8x8xf32>
    %cst_41 = arith.constant 0.353553385 : f32
    %84 = vector.broadcast %cst_41 : f32 to vector<8x8xf32>
    %85 = arith.mulf %83, %84 : vector<8x8xf32>
    %86 = arith.truncf %85 : vector<8x8xf32> to vector<8x8xbf16>
    %cst_42 = arith.constant dense<0.000000e+00> : vector<8x8xf32>
    %87 = tpu.matmul %86, %80, %cst_42 {dimension_numbers = #tpu.dot_dimension_numbers<[1], [1], [0], [0], [0, 0, 1, 0], [], []>} : vector<8x8xbf16>, vector<8x8xbf16>, vector<8x8xf32> -> vector<8x8xf32>
    %88 = vector.broadcast %1 : vector<1x8xf32> to vector<8x8xf32>
    %89 = arith.addf %87, %88 : vector<8x8xf32>
    %cst_43 = arith.constant dense<0xFF800000> : vector<8xf32>
    %90 = vector.multi_reduction <maximumf>, %89, %cst_43 [1] : vector<8x8xf32> to vector<8xf32>
    %91 = vector.shape_cast %90 : vector<8xf32> to vector<8x1xf32>
    %92 = vector.broadcast %91 : vector<8x1xf32> to vector<8x8xf32>
    %93 = arith.subf %89, %92 : vector<8x8xf32>
    %94 = math.exp %93 : vector<8x8xf32>
    %cst_44 = arith.constant dense<0.000000e+00> : vector<8xf32>
    %95 = vector.multi_reduction <add>, %94, %cst_44 [1] : vector<8x8xf32> to vector<8xf32>
    %96 = vector.shape_cast %95 : vector<8xf32> to vector<8x1xf32>
    %97 = arith.truncf %94 : vector<8x8xf32> to vector<8x8xbf16>
    %cst_45 = arith.constant dense<0.000000e+00> : vector<8x8xf32>
    %98 = tpu.matmul %97, %82, %cst_45 {dimension_numbers = #tpu.dot_dimension_numbers<[1], [0], [0], [1], [0, 0, 1, 1], [], []>} : vector<8x8xbf16>, vector<8x8xbf16>, vector<8x8xf32> -> vector<8x8xf32>
    %99 = tpu.reciprocal %96 {approx = true} : vector<8x1xf32> -> vector<8x1xf32>
    %100 = vector.broadcast %99 : vector<8x1xf32> to vector<8x8xf32>
    %101 = arith.mulf %98, %100 : vector<8x8xf32>
    %102 = tpu.concatenate %26, %51, %76, %101 in 1 : vector<8x8xf32>, vector<8x8xf32>, vector<8x8xf32>, vector<8x8xf32> -> vector<8x32xf32>
    %103 = arith.truncf %102 : vector<8x32xf32> to vector<8x32xbf16>
    %c0_46 = arith.constant 0 : index
    %c0_47 = arith.constant 0 : index
    %c0_48 = arith.constant 0 : index
    %104 = vector.load %arg3[%c0_46, %c0_47, %c0_48] : memref<1x8x32xbf16, #tpu.memory_space<vmem>>, vector<1x8x32xbf16>
    %105 = vector.shape_cast %104 : vector<1x8x32xbf16> to vector<8x32xbf16>
    %106 = vector.shape_cast %103 : vector<8x32xbf16> to vector<1x8x32xbf16>
    tpu.vector_store %arg3[%c0_46, %c0_47, %c0_48], %106 {strides = array<i32>} : memref<1x8x32xbf16, #tpu.memory_space<vmem>>, vector<1x8x32xbf16>,
    return
  }
  func.func @transform_0(%arg0: i32) -> (i32, i32, i32) {
    %c0_i32 = arith.constant 0 : i32
    %c0_i32_0 = arith.constant 0 : i32
    %c0_i32_1 = arith.constant 0 : i32
    return %arg0, %c0_i32, %c0_i32_0 : i32, i32, i32
  }
  func.func @transform_1(%arg0: i32) -> (i32, i32, i32) {
    %c0_i32 = arith.constant 0 : i32
    %c0_i32_0 = arith.constant 0 : i32
    %c0_i32_1 = arith.constant 0 : i32
    return %arg0, %c0_i32, %c0_i32_0 : i32, i32, i32
  }
  func.func @transform_2(%arg0: i32) -> (i32, i32, i32) {
    %c0_i32 = arith.constant 0 : i32
    %c0_i32_0 = arith.constant 0 : i32
    %c0_i32_1 = arith.constant 0 : i32
    return %arg0, %c0_i32, %c0_i32_0 : i32, i32, i32
  }
}

module attributes {stable_mosaic.version = 11 : i64} {
  func.func @_linear_kernel_1k(%arg0: i32, %arg1: i32, %arg2: memref<16x32xbf16, #tpu.memory_space<vmem>>, %arg3: memref<32x64xbf16, #tpu.memory_space<vmem>>, %arg4: memref<1x64xf32, #tpu.memory_space<vmem>>, %arg5: memref<16x64xbf16, #tpu.memory_space<vmem>>) attributes {dimension_semantics = [#tpu.dimension_semantics<parallel>, #tpu.dimension_semantics<parallel>], iteration_bounds = array<i64: 1, 1>, scalar_prefetch = 0 : i64, scratch_operands = 0 : i64, tpu.core_type = #tpu.core_type<tc>, window_params = [{transform_indices = @transform_0, window_bounds = array<i64: 16, 32>}, {transform_indices = @transform_1, window_bounds = array<i64: 32, 64>}, {transform_indices = @transform_2, window_bounds = array<i64: 1, 64>}, {transform_indices = @transform_3, window_bounds = array<i64: 16, 64>}]} {
    %c0 = arith.constant 0 : index
    %c0_0 = arith.constant 0 : index
    %0 = vector.load %arg2[%c0, %c0_0] : memref<16x32xbf16, #tpu.memory_space<vmem>>, vector<16x32xbf16>
    %c0_1 = arith.constant 0 : index
    %c0_2 = arith.constant 0 : index
    %1 = vector.load %arg3[%c0_1, %c0_2] : memref<32x64xbf16, #tpu.memory_space<vmem>>, vector<32x64xbf16>
    %cst = arith.constant dense<0.000000e+00> : vector<16x64xf32>
    %2 = tpu.matmul %0, %1, %cst {dimension_numbers = #tpu.dot_dimension_numbers<[1], [0], [0], [1], [0, 0, 1, 1], [], []>} : vector<16x32xbf16>, vector<32x64xbf16>, vector<16x64xf32> -> vector<16x64xf32>
    %c0_3 = arith.constant 0 : index
    %c0_4 = arith.constant 0 : index
    %3 = vector.load %arg4[%c0_3, %c0_4] : memref<1x64xf32, #tpu.memory_space<vmem>>, vector<1x64xf32>
    %4 = vector.broadcast %3 : vector<1x64xf32> to vector<16x64xf32>
    %5 = arith.addf %2, %4 : vector<16x64xf32>
    %cst_5 = arith.constant 5.000000e-01 : f32
    %6 = vector.broadcast %cst_5 : f32 to vector<16x64xf32>
    %7 = arith.mulf %6, %5 : vector<16x64xf32>
    %cst_6 = arith.constant 4.471500e-02 : f32
    %8 = vector.broadcast %cst_6 : f32 to vector<16x64xf32>
    %9 = arith.mulf %8, %5 : vector<16x64xf32>
    %10 = arith.mulf %9, %5 : vector<16x64xf32>
    %11 = arith.mulf %10, %5 : vector<16x64xf32>
    %12 = arith.addf %5, %11 : vector<16x64xf32>
    %cst_7 = arith.constant 0.797884583 : f32
    %13 = vector.broadcast %cst_7 : f32 to vector<16x64xf32>
    %14 = arith.mulf %13, %12 : vector<16x64xf32>
    %15 = math.tanh %14 : vector<16x64xf32>
    %cst_8 = arith.constant 1.000000e+00 : f32
    %16 = vector.broadcast %cst_8 : f32 to vector<16x64xf32>
    %17 = arith.addf %16, %15 : vector<16x64xf32>
    %18 = arith.mulf %7, %17 : vector<16x64xf32>
    %19 = arith.truncf %18 : vector<16x64xf32> to vector<16x64xbf16>
    %c0_9 = arith.constant 0 : index
    %c0_10 = arith.constant 0 : index
    %20 = vector.load %arg5[%c0_9, %c0_10] : memref<16x64xbf16, #tpu.memory_space<vmem>>, vector<16x64xbf16>
    tpu.vector_store %arg5[%c0_9, %c0_10], %19 {strides = array<i32>} : memref<16x64xbf16, #tpu.memory_space<vmem>>, vector<16x64xbf16>,
    return
  }
  func.func @transform_0(%arg0: i32, %arg1: i32) -> (i32, i32) {
    %c0_i32 = arith.constant 0 : i32
    %c0_i32_0 = arith.constant 0 : i32
    return %arg0, %c0_i32 : i32, i32
  }
  func.func @transform_1(%arg0: i32, %arg1: i32) -> (i32, i32) {
    %c0_i32 = arith.constant 0 : i32
    %c0_i32_0 = arith.constant 0 : i32
    return %c0_i32, %arg1 : i32, i32
  }
  func.func @transform_2(%arg0: i32, %arg1: i32) -> (i32, i32) {
    %c0_i32 = arith.constant 0 : i32
    %c0_i32_0 = arith.constant 0 : i32
    return %c0_i32, %arg1 : i32, i32
  }
  func.func @transform_3(%arg0: i32, %arg1: i32) -> (i32, i32) {
    %c0_i32 = arith.constant 0 : i32
    return %arg0, %arg1 : i32, i32
  }
}

module attributes {stable_mosaic.version = 11 : i64} {
  func.func @_linear_res_ln_kernel_1k(%arg0: i32, %arg1: memref<16x64xbf16, #tpu.memory_space<vmem>>, %arg2: memref<64x32xbf16, #tpu.memory_space<vmem>>, %arg3: memref<1x32xf32, #tpu.memory_space<vmem>>, %arg4: memref<16x32xbf16, #tpu.memory_space<vmem>>, %arg5: memref<1x32xf32, #tpu.memory_space<vmem>>, %arg6: memref<1x32xf32, #tpu.memory_space<vmem>>, %arg7: memref<16x32xbf16, #tpu.memory_space<vmem>>) attributes {dimension_semantics = [#tpu.dimension_semantics<parallel>], iteration_bounds = array<i64: 1>, scalar_prefetch = 0 : i64, scratch_operands = 0 : i64, tpu.core_type = #tpu.core_type<tc>, window_params = [{transform_indices = @transform_0, window_bounds = array<i64: 16, 64>}, {pipeline_mode = #tpu.pipeline_mode<synchronous>, transform_indices = @transform_1, window_bounds = array<i64: 64, 32>}, {pipeline_mode = #tpu.pipeline_mode<synchronous>, transform_indices = @transform_2, window_bounds = array<i64: 1, 32>}, {transform_indices = @transform_3, window_bounds = array<i64: 16, 32>}, {pipeline_mode = #tpu.pipeline_mode<synchronous>, transform_indices = @transform_4, window_bounds = array<i64: 1, 32>}, {pipeline_mode = #tpu.pipeline_mode<synchronous>, transform_indices = @transform_5, window_bounds = array<i64: 1, 32>}, {transform_indices = @transform_6, window_bounds = array<i64: 16, 32>}]} {
    %c0 = arith.constant 0 : index
    %c0_0 = arith.constant 0 : index
    %0 = vector.load %arg1[%c0, %c0_0] : memref<16x64xbf16, #tpu.memory_space<vmem>>, vector<16x64xbf16>
    %c0_1 = arith.constant 0 : index
    %c0_2 = arith.constant 0 : index
    %1 = vector.load %arg2[%c0_1, %c0_2] : memref<64x32xbf16, #tpu.memory_space<vmem>>, vector<64x32xbf16>
    %cst = arith.constant dense<0.000000e+00> : vector<16x32xf32>
    %2 = tpu.matmul %0, %1, %cst {dimension_numbers = #tpu.dot_dimension_numbers<[1], [0], [0], [1], [0, 0, 1, 1], [], []>} : vector<16x64xbf16>, vector<64x32xbf16>, vector<16x32xf32> -> vector<16x32xf32>
    %c0_3 = arith.constant 0 : index
    %c0_4 = arith.constant 0 : index
    %3 = vector.load %arg3[%c0_3, %c0_4] : memref<1x32xf32, #tpu.memory_space<vmem>>, vector<1x32xf32>
    %4 = vector.broadcast %3 : vector<1x32xf32> to vector<16x32xf32>
    %5 = arith.addf %2, %4 : vector<16x32xf32>
    %c0_5 = arith.constant 0 : index
    %c0_6 = arith.constant 0 : index
    %6 = vector.load %arg4[%c0_5, %c0_6] : memref<16x32xbf16, #tpu.memory_space<vmem>>, vector<16x32xbf16>
    %7 = arith.extf %6 : vector<16x32xbf16> to vector<16x32xf32>
    %8 = arith.addf %5, %7 : vector<16x32xf32>
    %cst_7 = arith.constant dense<0.000000e+00> : vector<16xf32>
    %9 = vector.multi_reduction <add>, %8, %cst_7 [1] : vector<16x32xf32> to vector<16xf32>
    %10 = vector.shape_cast %9 : vector<16xf32> to vector<16x1xf32>
    %cst_8 = arith.constant 3.200000e+01 : f32
    %11 = vector.broadcast %cst_8 : f32 to vector<16x1xf32>
    %12 = arith.divf %10, %11 : vector<16x1xf32>
    %13 = vector.broadcast %12 : vector<16x1xf32> to vector<16x32xf32>
    %14 = arith.subf %8, %13 : vector<16x32xf32>
    %15 = arith.mulf %14, %14 : vector<16x32xf32>
    %cst_9 = arith.constant dense<0.000000e+00> : vector<16xf32>
    %16 = vector.multi_reduction <add>, %15, %cst_9 [1] : vector<16x32xf32> to vector<16xf32>
    %17 = vector.shape_cast %16 : vector<16xf32> to vector<16x1xf32>
    %cst_10 = arith.constant 3.200000e+01 : f32
    %18 = vector.broadcast %cst_10 : f32 to vector<16x1xf32>
    %19 = arith.divf %17, %18 : vector<16x1xf32>
    %20 = vector.broadcast %12 : vector<16x1xf32> to vector<16x32xf32>
    %21 = arith.subf %8, %20 : vector<16x32xf32>
    %cst_11 = arith.constant 9.99999996E-13 : f32
    %22 = vector.broadcast %cst_11 : f32 to vector<16x1xf32>
    %23 = arith.addf %19, %22 : vector<16x1xf32>
    %24 = math.rsqrt %23 : vector<16x1xf32>
    %25 = vector.broadcast %24 : vector<16x1xf32> to vector<16x32xf32>
    %26 = arith.mulf %21, %25 : vector<16x32xf32>
    %c0_12 = arith.constant 0 : index
    %c0_13 = arith.constant 0 : index
    %27 = vector.load %arg5[%c0_12, %c0_13] : memref<1x32xf32, #tpu.memory_space<vmem>>, vector<1x32xf32>
    %28 = vector.broadcast %27 : vector<1x32xf32> to vector<16x32xf32>
    %29 = arith.mulf %26, %28 : vector<16x32xf32>
    %c0_14 = arith.constant 0 : index
    %c0_15 = arith.constant 0 : index
    %30 = vector.load %arg6[%c0_14, %c0_15] : memref<1x32xf32, #tpu.memory_space<vmem>>, vector<1x32xf32>
    %31 = vector.broadcast %30 : vector<1x32xf32> to vector<16x32xf32>
    %32 = arith.addf %29, %31 : vector<16x32xf32>
    %33 = arith.truncf %32 : vector<16x32xf32> to vector<16x32xbf16>
    %c0_16 = arith.constant 0 : index
    %c0_17 = arith.constant 0 : index
    %34 = vector.load %arg7[%c0_16, %c0_17] : memref<16x32xbf16, #tpu.memory_space<vmem>>, vector<16x32xbf16>
    tpu.vector_store %arg7[%c0_16, %c0_17], %33 {strides = array<i32>} : memref<16x32xbf16, #tpu.memory_space<vmem>>, vector<16x32xbf16>,
    return
  }
  func.func @transform_0(%arg0: i32) -> (i32, i32) {
    %c0_i32 = arith.constant 0 : i32
    %c0_i32_0 = arith.constant 0 : i32
    return %arg0, %c0_i32 : i32, i32
  }
  func.func @transform_1(%arg0: i32) -> (i32, i32) {
    %c0_i32 = arith.constant 0 : i32
    %c0_i32_0 = arith.constant 0 : i32
    %c0_i32_1 = arith.constant 0 : i32
    return %c0_i32, %c0_i32_0 : i32, i32
  }
  func.func @transform_2(%arg0: i32) -> (i32, i32) {
    %c0_i32 = arith.constant 0 : i32
    %c0_i32_0 = arith.constant 0 : i32
    %c0_i32_1 = arith.constant 0 : i32
    return %c0_i32, %c0_i32_0 : i32, i32
  }
  func.func @transform_3(%arg0: i32) -> (i32, i32) {
    %c0_i32 = arith.constant 0 : i32
    %c0_i32_0 = arith.constant 0 : i32
    return %arg0, %c0_i32 : i32, i32
  }
  func.func @transform_4(%arg0: i32) -> (i32, i32) {
    %c0_i32 = arith.constant 0 : i32
    %c0_i32_0 = arith.constant 0 : i32
    %c0_i32_1 = arith.constant 0 : i32
    return %c0_i32, %c0_i32_0 : i32, i32
  }
  func.func @transform_5(%arg0: i32) -> (i32, i32) {
    %c0_i32 = arith.constant 0 : i32
    %c0_i32_0 = arith.constant 0 : i32
    %c0_i32_1 = arith.constant 0 : i32
    return %c0_i32, %c0_i32_0 : i32, i32
  }
  func.func @transform_6(%arg0: i32) -> (i32, i32) {
    %c0_i32 = arith.constant 0 : i32
    %c0_i32_0 = arith.constant 0 : i32
    return %arg0, %c0_i32 : i32, i32
  }
}

module attributes {stable_mosaic.version = 11 : i64} {
  func.func @_linear_kernel_1k(%arg0: i32, %arg1: i32, %arg2: memref<2x32xbf16, #tpu.memory_space<vmem>>, %arg3: memref<32x128xbf16, #tpu.memory_space<vmem>>, %arg4: memref<1x128xf32, #tpu.memory_space<vmem>>, %arg5: memref<2x128xf32, #tpu.memory_space<vmem>>) attributes {dimension_semantics = [#tpu.dimension_semantics<parallel>, #tpu.dimension_semantics<parallel>], iteration_bounds = array<i64: 1, 1>, scalar_prefetch = 0 : i64, scratch_operands = 0 : i64, tpu.core_type = #tpu.core_type<tc>, window_params = [{transform_indices = @transform_0, window_bounds = array<i64: 2, 32>}, {transform_indices = @transform_1, window_bounds = array<i64: 32, 128>}, {transform_indices = @transform_2, window_bounds = array<i64: 1, 128>}, {transform_indices = @transform_3, window_bounds = array<i64: 2, 128>}]} {
    %c0 = arith.constant 0 : index
    %c0_0 = arith.constant 0 : index
    %0 = vector.load %arg2[%c0, %c0_0] : memref<2x32xbf16, #tpu.memory_space<vmem>>, vector<2x32xbf16>
    %c0_1 = arith.constant 0 : index
    %c0_2 = arith.constant 0 : index
    %1 = vector.load %arg3[%c0_1, %c0_2] : memref<32x128xbf16, #tpu.memory_space<vmem>>, vector<32x128xbf16>
    %cst = arith.constant dense<0.000000e+00> : vector<2x128xf32>
    %2 = tpu.matmul %0, %1, %cst {dimension_numbers = #tpu.dot_dimension_numbers<[1], [0], [0], [1], [0, 0, 1, 1], [], []>} : vector<2x32xbf16>, vector<32x128xbf16>, vector<2x128xf32> -> vector<2x128xf32>
    %c0_3 = arith.constant 0 : index
    %c0_4 = arith.constant 0 : index
    %3 = vector.load %arg4[%c0_3, %c0_4] : memref<1x128xf32, #tpu.memory_space<vmem>>, vector<1x128xf32>
    %4 = vector.broadcast %3 : vector<1x128xf32> to vector<2x128xf32>
    %5 = arith.addf %2, %4 : vector<2x128xf32>
    %c0_5 = arith.constant 0 : index
    %c0_6 = arith.constant 0 : index
    %6 = vector.load %arg5[%c0_5, %c0_6] : memref<2x128xf32, #tpu.memory_space<vmem>>, vector<2x128xf32>
    tpu.vector_store %arg5[%c0_5, %c0_6], %5 {strides = array<i32>} : memref<2x128xf32, #tpu.memory_space<vmem>>, vector<2x128xf32>,
    return
  }
  func.func @transform_0(%arg0: i32, %arg1: i32) -> (i32, i32) {
    %c0_i32 = arith.constant 0 : i32
    %c0_i32_0 = arith.constant 0 : i32
    return %arg0, %c0_i32 : i32, i32
  }
  func.func @transform_1(%arg0: i32, %arg1: i32) -> (i32, i32) {
    %c0_i32 = arith.constant 0 : i32
    %c0_i32_0 = arith.constant 0 : i32
    return %c0_i32, %arg1 : i32, i32
  }
  func.func @transform_2(%arg0: i32, %arg1: i32) -> (i32, i32) {
    %c0_i32 = arith.constant 0 : i32
    %c0_i32_0 = arith.constant 0 : i32
    return %c0_i32, %arg1 : i32, i32
  }
  func.func @transform_3(%arg0: i32, %arg1: i32) -> (i32, i32) {
    %c0_i32 = arith.constant 0 : i32
    return %arg0, %arg1 : i32, i32
  }
}

</mosaic_0001>

<llo_original>
// kernel: text_forward.12
$region0: #{text_forward.12}
  #allocation0 [shape = 'u32[]', space=smem, size = 0x4, offset = 0x4, fixed_abs, tag = 'smem constant byte address 0x4 - core index']
  #allocation1 [shape = 'u32[144,128]{1,0:T(1,128)}', space=vmem, size = 0x12000, scoped, tag = 'internal scratch']
  %s0 = inlined_call_operand.vmem [shape: f32[16,32], index: 0, kind: input, shape index: {}]
  %s1 = inlined_call_operand.vmem [shape: f32[1,32], index: 1, kind: input, shape index: {}]
  %s2 = inlined_call_operand.vmem [shape: f32[1,32], index: 2, kind: input, shape index: {}]
  %s3 = inlined_call_operand.vmem [shape: bf16[16,32], index: 3, kind: output, shape index: {}]
  %s4 = sld [smem:[#allocation0]]
  $region22: #{text_forward.12} parent=0
    _
  %s6 = ssub.s32 1, %s4
  %s7 = scalar_select 0, %s6, %s4
  // Predicated region
  $region2: #{text_forward.12} parent=0 // pred_check
    _
  $region3: #{text_forward.12} parent=0 // pred_check_branch
    %9 = sbr.rel (0) target = $region5
  $region4: #{text_forward.12} parent=0 // pred_region
    _
  $region5: #{text_forward.12} parent=0 // pred_fallthru
    _
  // Predicated region
  $region6: #{text_forward.12} parent=0 // pred_check
    _
  $region7: #{text_forward.12} parent=0 // pred_check_branch
    %11 = sbr.rel (0) target = $region9
  $region8: #{text_forward.12} parent=0 // pred_region
    _
  $region9: #{text_forward.12} parent=0 // pred_fallthru
    _
  // Predicated region
  $region10: #{text_forward.12} parent=0 // pred_check
    _
  $region11: #{text_forward.12} parent=0 // pred_check_branch
    %13 = sbr.rel (0) target = $region13
  $region12: #{text_forward.12} parent=0 // pred_region
    _
  $region13: #{text_forward.12} parent=0 // pred_fallthru
    _
  %v14 = vld [vmem:[%s0] sm:$0xff]
  %v15 = vld [vmem:[%s0 + $0x8] sm:$0xff]
  %vm16 = vcmask 261120
  %v17 = vsel %vm16, %v14, 0.0
  %18 = vadd.xlane.f32.xlu0 %v17
  %v19 = vpop.xlane.xlu0 %18
  %v20 = vsel %vm16, %v15, 0.0
  %21 = vadd.xlane.f32.xlu0 %v20
  %v22 = vpop.xlane.xlu0 %21
  %v23 = vrcp.pop 32.0
  %v24 = vmul.f32 %v19, %v23
  %v25 = vmul.f32 %v22, %v23
  %v26 = vsub.f32 %v14, %v24
  %v27 = vsub.f32 %v15, %v25
  %v28 = vmul.f32 %v26, %v26
  %v29 = vmul.f32 %v27, %v27
  %v30 = vsel %vm16, %v28, 0.0
  %31 = vadd.xlane.f32.xlu0 %v30
  %v32 = vpop.xlane.xlu0 %31
  %v33 = vsel %vm16, %v29, 0.0
  %34 = vadd.xlane.f32.xlu0 %v33
  %v35 = vpop.xlane.xlu0 %34
  %v36 = vmul.f32 %v32, %v23
  %v37 = vmul.f32 %v35, %v23
  %v38 = vadd.f32 %v36, 1e-12
  %v39 = vadd.f32 %v37, 1e-12
  %v40 = vrsqrt.pop %v38
  %v41 = vrsqrt.pop %v39
  %v42 = vmul.f32 %v26, %v40
  %v43 = vmul.f32 %v27, %v41
  %v44 = vld [vmem:[%s1] sm:$0x1]
  %v46 = vlaneseq
  %v47 = vshrl.u32 %v46, 7
  %v48 = vsub.s32 0, %v47
  %v49 = vrot.slane %v44, %v48
  %v51 = vmul.f32 %v42, %v49
  %v52 = vmul.f32 %v43, %v49
  %v53 = vld [vmem:[%s2] sm:$0x1]
  %v55 = vlaneseq
  %v56 = vshrl.u32 %v55, 7
  %v57 = vsub.s32 0, %v56
  %v58 = vrot.slane %v53, %v57
  %v60 = vadd.f32 %v51, %v58
  %v61 = vadd.f32 %v52, %v58
  %v62 = vpack.c.bf16 %v61, %v60
  %v64 = vunpack.c.l.b16 %v62
  %v65 = vunpack.c.h.b16 %v62
  %v66 = vpack.c.b16 %v64, %v64
  %v67 = vpack.c.b16 %v65, %v65
  %vm70 = vcmask 257024
  %71 = vst.msk [vmem:[%s3] sm:$0xf] %vm70, %v66
  %72 = vst.msk [vmem:[%s3 + $0x4] sm:$0xf] %vm70, %v67
  // Predicated region
  $region14: #{text_forward.12} parent=0 // pred_check
    _
  $region15: #{text_forward.12} parent=0 // pred_check_branch
    %74 = sbr.rel (0) target = $region17
  $region16: #{text_forward.12} parent=0 // pred_region
    _
  $region17: #{text_forward.12} parent=0 // pred_fallthru
    _
  // Predicated region
  $region18: #{text_forward.12} parent=0 // pred_check
    _
  $region19: #{text_forward.12} parent=0 // pred_check_branch
    %76 = sbr.rel (0) target = $region21
  $region20: #{text_forward.12} parent=0 // pred_region
    _
  $region21: #{text_forward.12} parent=0 // pred_fallthru
    _

// kernel: text_forward.13
$region0: #{text_forward.13}
  #allocation0 [shape = 'u32[]', space=smem, size = 0x4, offset = 0x4, fixed_abs, tag = 'smem constant byte address 0x4 - core index']
  #allocation1 [shape = 'u32[144,128]{1,0:T(1,128)}', space=vmem, size = 0x12000, scoped, tag = 'internal scratch']
  %s0 = inlined_call_operand.vmem [shape: bf16[16,32], index: 0, kind: input, shape index: {}]
  %s1 = inlined_call_operand.vmem [shape: bf16[32,96], index: 1, kind: input, shape index: {}]
  %s2 = inlined_call_operand.vmem [shape: f32[1,96], index: 2, kind: input, shape index: {}]
  %s3 = inlined_call_operand.vmem [shape: bf16[16,96], index: 3, kind: output, shape index: {}]
  %s4 = sld [smem:[#allocation0]]
  $region22: #{text_forward.13} parent=0
    _
  %s6 = ssub.s32 1, %s4
  %s7 = scalar_select 0, %s6, %s4
  // Predicated region
  $region2: #{text_forward.13} parent=0 // pred_check
    _
  $region3: #{text_forward.13} parent=0 // pred_check_branch
    %9 = sbr.rel (0) target = $region5
  $region4: #{text_forward.13} parent=0 // pred_region
    _
  $region5: #{text_forward.13} parent=0 // pred_fallthru
    _
  // Predicated region
  $region6: #{text_forward.13} parent=0 // pred_check
    _
  $region7: #{text_forward.13} parent=0 // pred_check_branch
    %11 = sbr.rel (0) target = $region9
  $region8: #{text_forward.13} parent=0 // pred_region
    _
  $region9: #{text_forward.13} parent=0 // pred_fallthru
    _
  // Predicated region
  $region10: #{text_forward.13} parent=0 // pred_check
    _
  $region11: #{text_forward.13} parent=0 // pred_check_branch
    %13 = sbr.rel (0) target = $region13
  $region12: #{text_forward.13} parent=0 // pred_region
    _
  $region13: #{text_forward.13} parent=0 // pred_fallthru
    _
  %v15 = vld [vmem:[%s0] sm:$0xf]
  %v16 = vld [vmem:[%s0 + $0x4] sm:$0xf]
  %v17 = vld [vmem:[%s1] sm:$0xf]
  %v18 = vld [vmem:[%s1 + $0x4] sm:$0xf]
  %v19 = vld [vmem:[%s1 + $0x8] sm:$0xf]
  %v20 = vld [vmem:[%s1 + $0xc] sm:$0xf]
  %v21 = vld [vmem:[%s2] sm:$0x1]
  %v23 = vlaneseq
  %v24 = vshrl.u32 %v23, 7
  %v25 = vsub.s32 0, %v24
  %v26 = vrot.slane %v21, %v25
  %v30 = vunpack.c.l.b16 %v15
  %v31 = vunpack.c.l.b16 %v16
  %v32 = vpack.c.b16 %v31, %v30
  %v37 = vunpack.c.l.b16 %v17
  %v38 = vunpack.c.l.b16 %v18
  %v39 = vunpack.c.l.b16 %v19
  %v40 = vunpack.c.l.b16 %v20
  %v41 = vpack.c.b16 %v38, %v37
  %v42 = vpack.c.b16 %v40, %v39
  %vm45 = vcmask 261120
  %v47 = vsel %vm45, %v32, 0
  %49 = vmatprep.subr.bf16.mxu0 0
  %50 = vmatpush1.bf16.msra.mxu0 %v41
  %51 = vmatprep.subr.bf16.mxu0 0
  %52 = vmatpush1.bf16.msra.mxu0 %v42
  %53 = vmatprep.subr.bf16.mxu0 0
  %54 = vmatpush1.bf16.msra.mxu0 0
  %55 = vmatprep.subr.bf16.mxu0 0
  %56 = vmatpush1.bf16.msra.mxu0 0
  %57 = vmatprep.subr.bf16.mxu0 0
  %58 = vmatpush1.bf16.msra.mxu0 0
  %59 = vmatprep.subr.bf16.mxu0 0
  %60 = vmatpush1.bf16.msra.mxu0 0
  %61 = vmatprep.subr.bf16.mxu0 0
  %62 = vmatpush1.bf16.msra.mxu0 0
  %63 = vmatprep.subr.bf16.mxu0 0
  %64 = vmatpush1.bf16.msra.mxu0 0
  %65 = vmatprep.subr.bf16.mxu0 0
  %66 = vmatpush1.bf16.msra.mxu0 0
  %67 = vmatprep.subr.bf16.mxu0 0
  %68 = vmatpush1.bf16.msra.mxu0 0
  %69 = vmatprep.subr.bf16.mxu0 0
  %70 = vmatpush1.bf16.msra.mxu0 0
  %71 = vmatprep.subr.bf16.mxu0 0
  %72 = vmatpush1.bf16.msra.mxu0 0
  %73 = vmatprep.subr.bf16.mxu0 0
  %74 = vmatpush1.bf16.msra.mxu0 0
  %75 = vmatprep.subr.bf16.mxu0 0
  %76 = vmatpush1.bf16.msra.mxu0 0
  %77 = vmatprep.subr.bf16.mxu0 0
  %78 = vmatpush1.bf16.msra.mxu0 0
  %79 = vmatprep.subr.bf16.mxu0 0
  %80 = vmatpush1.bf16.msra.mxu0 0
  %81 = vmatprep.mubr.bf16.mxu0 0
  %82 = vmatmul.mubr.bf16.gmra.mrb[0].mxu0 %v47
  %v83 = vpop.f32.mrb[0].mxu0
  %v84 = vadd.f32 %v26, %v83
  %v85 = vpop.f32.mrb[0].mxu0
  %v86 = vpop.f32.mrb[0].mxu0
  %v87 = vadd.f32 %v26, %v86
  %v88 = vpop.f32.mrb[0].mxu0
  %89 = vdwg.mxu0
  %v90 = vpack.c.bf16 %v87, %v84
  %v92 = vunpack.c.l.b16 %v90
  %v93 = vunpack.c.h.b16 %v90
  %v94 = vpack.c.b16 %v92, %v92
  %v95 = vpack.c.b16 %v93, %v93
  %vm98 = vcmask 781312
  %99 = vst.msk [vmem:[%s3] sm:$0xf] %vm98, %v94
  %100 = vst.msk [vmem:[%s3 + $0x4] sm:$0xf] %vm98, %v95
  // Predicated region
  $region14: #{text_forward.13} parent=0 // pred_check
    _
  $region15: #{text_forward.13} parent=0 // pred_check_branch
    %102 = sbr.rel (0) target = $region17
  $region16: #{text_forward.13} parent=0 // pred_region
    _
  $region17: #{text_forward.13} parent=0 // pred_fallthru
    _
  // Predicated region
  $region18: #{text_forward.13} parent=0 // pred_check
    _
  $region19: #{text_forward.13} parent=0 // pred_check_branch
    %104 = sbr.rel (0) target = $region21
  $region20: #{text_forward.13} parent=0 // pred_region
    _
  $region21: #{text_forward.13} parent=0 // pred_fallthru
    _

// kernel: text_forward.15
$region0: #{text_forward.15}
  #allocation0 [shape = 'u32[]', space=smem, size = 0x4, offset = 0x4, fixed_abs, tag = 'smem constant byte address 0x4 - core index']
  #allocation1 [shape = 'u32[144,128]{1,0:T(1,128)}', space=vmem, size = 0x12000, scoped, tag = 'internal scratch']
  %s0 = inlined_call_operand.vmem [shape: bf16[16,32], index: 0, kind: input, shape index: {}]
  %s1 = inlined_call_operand.vmem [shape: bf16[32,32], index: 1, kind: input, shape index: {}]
  %s2 = inlined_call_operand.vmem [shape: f32[1,32], index: 2, kind: input, shape index: {}]
  %s3 = inlined_call_operand.vmem [shape: bf16[16,32], index: 3, kind: input, shape index: {}]
  %s4 = inlined_call_operand.vmem [shape: f32[1,32], index: 4, kind: input, shape index: {}]
  %s5 = inlined_call_operand.vmem [shape: f32[1,32], index: 5, kind: input, shape index: {}]
  %s6 = inlined_call_operand.vmem [shape: bf16[16,32], index: 6, kind: output, shape index: {}]
  %s7 = sld [smem:[#allocation0]]
  $region34: #{text_forward.15} parent=0
    _
  %s9 = ssub.s32 1, %s7
  %s10 = scalar_select 0, %s9, %s7
  // Predicated region
  $region2: #{text_forward.15} parent=0 // pred_check
    _
  $region3: #{text_forward.15} parent=0 // pred_check_branch
    %12 = sbr.rel (0) target = $region5
  $region4: #{text_forward.15} parent=0 // pred_region
    _
  $region5: #{text_forward.15} parent=0 // pred_fallthru
    _
  // Predicated region
  $region6: #{text_forward.15} parent=0 // pred_check
    _
  $region7: #{text_forward.15} parent=0 // pred_check_branch
    %14 = sbr.rel (0) target = $region9
  $region8: #{text_forward.15} parent=0 // pred_region
    _
  $region9: #{text_forward.15} parent=0 // pred_fallthru
    _
  // Predicated region
  $region10: #{text_forward.15} parent=0 // pred_check
    _
  $region11: #{text_forward.15} parent=0 // pred_check_branch
    %16 = sbr.rel (0) target = $region13
  $region12: #{text_forward.15} parent=0 // pred_region
    _
  $region13: #{text_forward.15} parent=0 // pred_fallthru
    _
  // Predicated region
  $region14: #{text_forward.15} parent=0 // pred_check
    _
  $region15: #{text_forward.15} parent=0 // pred_check_branch
    %18 = sbr.rel (0) target = $region17
  $region16: #{text_forward.15} parent=0 // pred_region
    _
  $region17: #{text_forward.15} parent=0 // pred_fallthru
    _
  // Predicated region
  $region18: #{text_forward.15} parent=0 // pred_check
    _
  $region19: #{text_forward.15} parent=0 // pred_check_branch
    %20 = sbr.rel (0) target = $region21
  $region20: #{text_forward.15} parent=0 // pred_region
    _
  $region21: #{text_forward.15} parent=0 // pred_fallthru
    _
  // Predicated region
  $region22: #{text_forward.15} parent=0 // pred_check
    _
  $region23: #{text_forward.15} parent=0 // pred_check_branch
    %22 = sbr.rel (0) target = $region25
  $region24: #{text_forward.15} parent=0 // pred_region
    _
  $region25: #{text_forward.15} parent=0 // pred_fallthru
    _
  %v24 = vld [vmem:[%s0] sm:$0xf]
  %v25 = vld [vmem:[%s0 + $0x4] sm:$0xf]
  %v26 = vld [vmem:[%s1] sm:$0xf]
  %v27 = vld [vmem:[%s1 + $0x4] sm:$0xf]
  %v28 = vld [vmem:[%s1 + $0x8] sm:$0xf]
  %v29 = vld [vmem:[%s1 + $0xc] sm:$0xf]
  %v30 = vld [vmem:[%s2] sm:$0x1]
  %v32 = vlaneseq
  %v33 = vshrl.u32 %v32, 7
  %v34 = vsub.s32 0, %v33
  %v35 = vrot.slane %v30, %v34
  %v39 = vunpack.c.l.b16 %v24
  %v40 = vunpack.c.l.b16 %v25
  %v41 = vpack.c.b16 %v40, %v39
  %v46 = vunpack.c.l.b16 %v26
  %v47 = vunpack.c.l.b16 %v27
  %v48 = vunpack.c.l.b16 %v28
  %v49 = vunpack.c.l.b16 %v29
  %v50 = vpack.c.b16 %v47, %v46
  %v51 = vpack.c.b16 %v49, %v48
  %vm54 = vcmask 261120
  %v56 = vsel %vm54, %v41, 0
  %58 = vmatprep.subr.bf16.mxu0 0
  %59 = vmatpush1.bf16.msra.mxu0 %v50
  %60 = vmatprep.subr.bf16.mxu0 0
  %61 = vmatpush1.bf16.msra.mxu0 %v51
  %62 = vmatprep.subr.bf16.mxu0 0
  %63 = vmatpush1.bf16.msra.mxu0 0
  %64 = vmatprep.subr.bf16.mxu0 0
  %65 = vmatpush1.bf16.msra.mxu0 0
  %66 = vmatprep.subr.bf16.mxu0 0
  %67 = vmatpush1.bf16.msra.mxu0 0
  %68 = vmatprep.subr.bf16.mxu0 0
  %69 = vmatpush1.bf16.msra.mxu0 0
  %70 = vmatprep.subr.bf16.mxu0 0
  %71 = vmatpush1.bf16.msra.mxu0 0
  %72 = vmatprep.subr.bf16.mxu0 0
  %73 = vmatpush1.bf16.msra.mxu0 0
  %74 = vmatprep.subr.bf16.mxu0 0
  %75 = vmatpush1.bf16.msra.mxu0 0
  %76 = vmatprep.subr.bf16.mxu0 0
  %77 = vmatpush1.bf16.msra.mxu0 0
  %78 = vmatprep.subr.bf16.mxu0 0
  %79 = vmatpush1.bf16.msra.mxu0 0
  %80 = vmatprep.subr.bf16.mxu0 0
  %81 = vmatpush1.bf16.msra.mxu0 0
  %82 = vmatprep.subr.bf16.mxu0 0
  %83 = vmatpush1.bf16.msra.mxu0 0
  %84 = vmatprep.subr.bf16.mxu0 0
  %85 = vmatpush1.bf16.msra.mxu0 0
  %86 = vmatprep.subr.bf16.mxu0 0
  %87 = vmatpush1.bf16.msra.mxu0 0
  %88 = vmatprep.subr.bf16.mxu0 0
  %89 = vmatpush1.bf16.msra.mxu0 0
  %90 = vmatprep.mubr.bf16.mxu0 0
  %91 = vmatmul.mubr.bf16.gmra.mrb[0].mxu0 %v56
  %v92 = vpop.f32.mrb[0].mxu0
  %v93 = vadd.f32 %v35, %v92
  %v94 = vpop.f32.mrb[0].mxu0
  %v95 = vpop.f32.mrb[0].mxu0
  %v96 = vadd.f32 %v35, %v95
  %v97 = vpop.f32.mrb[0].mxu0
  %98 = vdwg.mxu0
  %v99 = vld [vmem:[%s3] sm:$0xf]
  %v100 = vld [vmem:[%s3 + $0x4] sm:$0xf]
  %v101 = vunpack.c.l.bf16 %v99
  %v102 = vunpack.c.l.bf16 %v100
  %v103 = vadd.f32 %v93, %v101
  %v104 = vadd.f32 %v96, %v102
  %v105 = vsel %vm54, %v103, 0.0
  %106 = vadd.xlane.f32.xlu0 %v105
  %v107 = vpop.xlane.xlu0 %106
  %v108 = vsel %vm54, %v104, 0.0
  %109 = vadd.xlane.f32.xlu0 %v108
  %v110 = vpop.xlane.xlu0 %109
  %v111 = vrcp.pop 32.0
  %v112 = vmul.f32 %v107, %v111
  %v113 = vmul.f32 %v110, %v111
  %v114 = vsub.f32 %v103, %v112
  %v115 = vsub.f32 %v104, %v113
  %v116 = vmul.f32 %v114, %v114
  %v117 = vmul.f32 %v115, %v115
  %v118 = vsel %vm54, %v116, 0.0
  %119 = vadd.xlane.f32.xlu0 %v118
  %v120 = vpop.xlane.xlu0 %119
  %v121 = vsel %vm54, %v117, 0.0
  %122 = vadd.xlane.f32.xlu0 %v121
  %v123 = vpop.xlane.xlu0 %122
  %v124 = vmul.f32 %v120, %v111
  %v125 = vmul.f32 %v123, %v111
  %v126 = vadd.f32 %v124, 1e-12
  %v127 = vadd.f32 %v125, 1e-12
  %v128 = vrsqrt.pop %v126
  %v129 = vrsqrt.pop %v127
  %v130 = vmul.f32 %v114, %v128
  %v131 = vmul.f32 %v115, %v129
  %v132 = vld [vmem:[%s4] sm:$0x1]
  %v134 = vlaneseq
  %v135 = vshrl.u32 %v134, 7
  %v136 = vsub.s32 0, %v135
  %v137 = vrot.slane %v132, %v136
  %v139 = vmul.f32 %v130, %v137
  %v140 = vmul.f32 %v131, %v137
  %v141 = vld [vmem:[%s5] sm:$0x1]
  %v143 = vlaneseq
  %v144 = vshrl.u32 %v143, 7
  %v145 = vsub.s32 0, %v144
  %v146 = vrot.slane %v141, %v145
  %v148 = vadd.f32 %v139, %v146
  %v149 = vadd.f32 %v140, %v146
  %v150 = vpack.c.bf16 %v149, %v148
  %v152 = vunpack.c.l.b16 %v150
  %v153 = vunpack.c.h.b16 %v150
  %v154 = vpack.c.b16 %v152, %v152
  %v155 = vpack.c.b16 %v153, %v153
  %vm158 = vcmask 257024
  %159 = vst.msk [vmem:[%s6] sm:$0xf] %vm158, %v154
  %160 = vst.msk [vmem:[%s6 + $0x4] sm:$0xf] %vm158, %v155
  // Predicated region
  $region26: #{text_forward.15} parent=0 // pred_check
    _
  $region27: #{text_forward.15} parent=0 // pred_check_branch
    %162 = sbr.rel (0) target = $region29
  $region28: #{text_forward.15} parent=0 // pred_region
    _
  $region29: #{text_forward.15} parent=0 // pred_fallthru
    _
  // Predicated region
  $region30: #{text_forward.15} parent=0 // pred_check
    _
  $region31: #{text_forward.15} parent=0 // pred_check_branch
    %164 = sbr.rel (0) target = $region33
  $region32: #{text_forward.15} parent=0 // pred_region
    _
  $region33: #{text_forward.15} parent=0 // pred_fallthru
    _

// kernel: text_forward.14
$region0: #{text_forward.14}
  #allocation0 [shape = 'u32[]', space=smem, size = 0x4, offset = 0x4, fixed_abs, tag = 'smem constant byte address 0x4 - core index']
  #allocation1 [shape = 'u32[144,128]{1,0:T(1,128)}', space=vmem, size = 0x12000, scoped, tag = 'internal scratch']
  %s0 = inlined_call_operand.vmem [shape: bf16[2,8,96], index: 0, kind: input, shape index: {}]
  %s1 = inlined_call_operand.vmem [shape: f32[2,1,8], index: 1, kind: input, shape index: {}]
  %s2 = inlined_call_operand.vmem [shape: bf16[2,8,32], index: 2, kind: output, shape index: {}]
  %s3 = sld [smem:[#allocation0]]
  $region41: #{text_forward.14} parent=0
    _
  %s5 = ssub.s32 1, %s3
  %s6 = scalar_select 0, %s5, %s3
  loop: start=0, step=1, limit=4
  $region2: #{text_forward.14} parent=0 // loop_pre_header
    _
  $region3: #{text_forward.14} parent=0 // loop_header
    %s8 = sphi 0, %s12
    %p9 = scmp.ge.s32.totalorder %s8, 4
    %s18 = sphi 0, %s20
    %s21 = sphi 0, %s18
    %s22 = sphi 0, %s21
    %s38 = sphi 0, %s22
    %s44 = sphi 0, %s46
    %s47 = sphi 0, %s44
    %s48 = sphi 0, %s47
    %s64 = sphi 0, %s48
    %s70 = sphi 0, %s72
    %s73 = sphi 0, %s70
    %s74 = sphi 0, %s73
    %s90 = sphi 0, %s74
  $region4: #{text_forward.14} parent=0 // loop_header_branch
    %11 = sbr.rel (%p9) target = $region8
  $region5: #{text_forward.14} parent=0 // loop_body
    %s13 = ssub.s32 %s8, 1
    %s14 = ssub.s32 %s8, 2
    %s15 = sadd.s32 %s8, 1
    %s16 = ssub.s32 %s8, %s15
    %p17 = scmp.eq.s32.totalorder %s16, 0
    %s19 = sadd.s32 %s18, 1
    %s20 = scalar_select %p17, %s18, %s19
    %p23 = pneg %p17
    %p24 = scmp.eq.s32.totalorder %s8, 1
    %p25 = por %p23, %p24
    %p26 = scmp.ne.s32.totalorder %s18, %s21
    %p27 = scmp.eq.s32.totalorder %s8, 0
    %p28 = por %p26, %p27
    %p29 = scmp.ne.s32.totalorder %s18, %s21
    %p30 = scmp.eq.s32.totalorder %s13, 1
    %p31 = por %p29, %p30
    %p32 = scmp.ne.s32.totalorder %s21, %s22
    %p33 = scmp.eq.s32.totalorder %s13, 0
    %p34 = por %p32, %p33
    %p35 = scmp.ne.s32.totalorder %s21, %s22
    %p36 = scmp.eq.s32.totalorder %s14, 1
    %p37 = por %p35, %p36
    %p39 = scmp.ne.s32.totalorder %s22, %s38
    %p40 = scmp.eq.s32.totalorder %s14, 0
    %p41 = por %p39, %p40
    %s42 = ssub.s32 %s8, %s15
    %p43 = scmp.eq.s32.totalorder %s42, 0
    %s45 = sadd.s32 %s44, 1
    %s46 = scalar_select %p43, %s44, %s45
    %p49 = pneg %p43
    %p50 = scmp.eq.s32.totalorder %s8, 1
    %p51 = por %p49, %p50
    %p52 = scmp.ne.s32.totalorder %s44, %s47
    %p53 = scmp.eq.s32.totalorder %s8, 0
    %p54 = por %p52, %p53
    %p55 = scmp.ne.s32.totalorder %s44, %s47
    %p56 = scmp.eq.s32.totalorder %s13, 1
    %p57 = por %p55, %p56
    %p58 = scmp.ne.s32.totalorder %s47, %s48
    %p59 = scmp.eq.s32.totalorder %s13, 0
    %p60 = por %p58, %p59
    %p61 = scmp.ne.s32.totalorder %s47, %s48
    %p62 = scmp.eq.s32.totalorder %s14, 1
    %p63 = por %p61, %p62
    %p65 = scmp.ne.s32.totalorder %s48, %s64
    %p66 = scmp.eq.s32.totalorder %s14, 0
    %p67 = por %p65, %p66
    %s68 = ssub.s32 %s8, %s15
    %p69 = scmp.eq.s32.totalorder %s68, 0
    %s71 = sadd.s32 %s70, 1
    %s72 = scalar_select %p69, %s70, %s71
    %p75 = pneg %p69
    %p76 = scmp.eq.s32.totalorder %s8, 1
    %p77 = por %p75, %p76
    %p78 = scmp.ne.s32.totalorder %s70, %s73
    %p79 = scmp.eq.s32.totalorder %s8, 0
    %p80 = por %p78, %p79
    %p81 = scmp.ne.s32.totalorder %s70, %s73
    %p82 = scmp.eq.s32.totalorder %s13, 1
    %p83 = por %p81, %p82
    %p84 = scmp.ne.s32.totalorder %s73, %s74
    %p85 = scmp.eq.s32.totalorder %s13, 0
    %p86 = por %p84, %p85
    %p87 = scmp.ne.s32.totalorder %s73, %s74
    %p88 = scmp.eq.s32.totalorder %s14, 1
    %p89 = por %p87, %p88
    %p91 = scmp.ne.s32.totalorder %s74, %s90
    %p92 = scmp.eq.s32.totalorder %s14, 0
    %p93 = por %p91, %p92
    %p94 = scmp.le.s32.totalorder 1, %s8
    %p95 = scmp.lt.s32.totalorder %s8, 3
    %p96 = pnand %p94, %p95
    %p97 = pneg %p96
    // Predicated region
    $region9: #{text_forward.14} parent=5 // pred_check
      _
    $region10: #{text_forward.14} parent=5 // pred_check_branch
      %99 = sbr.rel (%p96) target = $region12
    $region11: #{text_forward.14} parent=5 // pred_region
      %s100 = ssub.s32 %s8, 1
    $region12: #{text_forward.14} parent=5 // pred_fallthru
      _
    %p101 = scmp.lt.s32.totalorder %s8, 2
    // Predicated region
    $region13: #{text_forward.14} parent=5 // pred_check
      %p102 = pneg %p101
    $region14: #{text_forward.14} parent=5 // pred_check_branch
      %104 = sbr.rel (%p102) target = $region16
    $region15: #{text_forward.14} parent=5 // pred_region
      // Predicated region
      $region17: #{text_forward.14} parent=15 // pred_check
        %p105 = pneg %p28
      $region18: #{text_forward.14} parent=15 // pred_check_branch
        %107 = sbr.rel (%p105) target = $region20
      $region19: #{text_forward.14} parent=15 // pred_region
        %p108 = scmp.lt.s32.totalorder %s8, 1
        %s109 = scalar_select %p108, %s8, 1
        %s110 = smul.addr %s109, 4
        %s111 = scalar_lea.vmem %s0, %s110
      $region20: #{text_forward.14} parent=15 // pred_fallthru
        _
      // Predicated region
      $region21: #{text_forward.14} parent=15 // pred_check
        %p112 = pneg %p54
      $region22: #{text_forward.14} parent=15 // pred_check_branch
        %114 = sbr.rel (%p112) target = $region24
      $region23: #{text_forward.14} parent=15 // pred_region
        %p115 = scmp.lt.s32.totalorder %s8, 1
        %s116 = scalar_select %p115, %s8, 1
        %s117 = scalar_lea.vmem %s1, %s116
      $region24: #{text_forward.14} parent=15 // pred_fallthru
        _
    $region16: #{text_forward.14} parent=5 // pred_fallthru
      _
    %p118 = scmp.le.s32.totalorder 1, %s8
    %p119 = scmp.lt.s32.totalorder %s8, 3
    %p120 = pnand %p118, %p119
    %p121 = pneg %p120
    // Predicated region
    $region25: #{text_forward.14} parent=5 // pred_check
      _
    $region26: #{text_forward.14} parent=5 // pred_check_branch
      %123 = sbr.rel (%p120) target = $region28
    $region27: #{text_forward.14} parent=5 // pred_region
      %s124 = ssub.s32 %s8, 1
      %p125 = scmp.lt.s32.totalorder %s13, 1
      %s126 = scalar_select %p125, %s13, 1
      %s127 = smul.addr %s126, 4
      %s128 = scalar_lea.vmem %s0, %s127
      %p129 = pneg %p34
      %p130 = pneg %p31
      %p131 = scmp.lt.s32.totalorder %s13, 1
      %s132 = scalar_select %p131, %s13, 1
      %s133 = scalar_lea.vmem %s1, %s132
      %p134 = pneg %p60
      %p135 = pneg %p57
      %p136 = pneg %p86
      %p137 = pneg %p83
      %p138 = scmp.lt.s32.totalorder %s13, 1
      %s139 = scalar_select %p138, %s13, 1
      %s140 = smul.addr %s139, 4
      %s141 = scalar_lea.vmem %s2, %s140
      %p142 = scmp.lt.s32.totalorder %s13, 1
      %s143 = scalar_select %p142, %s13, 1
      %s144 = smul.addr %s143, 4
      %s145 = scalar_lea.vmem %s0, %s144
      %p146 = scmp.lt.s32.totalorder %s13, 1
      %s147 = scalar_select %p146, %s13, 1
      %s148 = scalar_lea.vmem %s1, %s147
      %p149 = scmp.lt.s32.totalorder %s13, 1
      %s150 = scalar_select %p149, %s13, 1
      %s151 = smul.addr %s150, 4
      %s152 = scalar_lea.vmem %s2, %s151
      %v154 = vld [vmem:[%s148] sm:$0x1]
      %v155 = vld [vmem:[%s145] sm:$0xf]
      %v156 = vunpack.c.l.bf16 %v155
      %v157 = vmul.f32 %v156, 0.35355338
      %v158 = vpack.c.bf16 %v157, %v157
      %v160 = vlaneseq
      %v161 = vshrl.u32 %v160, 7
      %v162 = vsub.s32 0, %v161
      %v163 = vrot.slane %v154, %v162
      %v166 = vunpack.c.l.b16 %v155
      %v167 = vpack.c.b16 %v166, %v166
      %168 = vrot.lane.b32.xlu0 %v167, 96
      %v169 = vpop.permute.xlu0 %168
      %vm170 = vcmask 64512
      %v172 = vsel %vm170, %v158, 0
      %v175 = vsel %vm170, %v169, 0
      %177 = vmatprep.subr.bf16.mxu0 0
      %178 = vmatpush1.bf16.xpose.msra.mxu0 %v175
      %179 = vmatprep.subr.bf16.mxu0 0
      %180 = vmatpush1.bf16.xpose.msra.mxu0 0
      %181 = vmatprep.subr.bf16.mxu0 0
      %182 = vmatpush1.bf16.xpose.msra.mxu0 0
      %183 = vmatprep.subr.bf16.mxu0 0
      %184 = vmatpush1.bf16.xpose.msra.mxu0 0
      %185 = vmatprep.subr.bf16.mxu0 0
      %186 = vmatpush1.bf16.xpose.msra.mxu0 0
      %187 = vmatprep.subr.bf16.mxu0 0
      %188 = vmatpush1.bf16.xpose.msra.mxu0 0
      %189 = vmatprep.subr.bf16.mxu0 0
      %190 = vmatpush1.bf16.xpose.msra.mxu0 0
      %191 = vmatprep.subr.bf16.mxu0 0
      %192 = vmatpush1.bf16.xpose.msra.mxu0 0
      %193 = vmatprep.subr.bf16.mxu0 0
      %194 = vmatpush1.bf16.xpose.msra.mxu0 0
      %195 = vmatprep.subr.bf16.mxu0 0
      %196 = vmatpush1.bf16.xpose.msra.mxu0 0
      %197 = vmatprep.subr.bf16.mxu0 0
      %198 = vmatpush1.bf16.xpose.msra.mxu0 0
      %199 = vmatprep.subr.bf16.mxu0 0
      %200 = vmatpush1.bf16.xpose.msra.mxu0 0
      %201 = vmatprep.subr.bf16.mxu0 0
      %202 = vmatpush1.bf16.xpose.msra.mxu0 0
      %203 = vmatprep.subr.bf16.mxu0 0
      %204 = vmatpush1.bf16.xpose.msra.mxu0 0
      %205 = vmatprep.subr.bf16.mxu0 0
      %206 = vmatpush1.bf16.xpose.msra.mxu0 0
      %207 = vmatprep.subr.bf16.mxu0 0
      %208 = vmatpush1.bf16.xpose.msra.mxu0 0
      %209 = vmatprep.mubr.bf16.mxu0 0
      %210 = vmatmul.mubr.bf16.gmra.mrb[0].mxu0 %v172
      %v211 = vpop.f32.mrb[0].mxu0
      %v212 = vadd.f32 %v163, %v211
      %v213 = vpop.f32.mrb[0].mxu0
      %v214 = vpop.f32.mrb[0].mxu0
      %v215 = vpop.f32.mrb[0].mxu0
      %216 = vdwg.mxu0
      %v217 = vsel %vm170, %v212, -inf
      %218 = vmax.xlane.f32.xlu0 %v217
      %v219 = vpop.xlane.xlu0 %218
      %v220 = vsub.f32 %v212, %v219
      %v221 = vmul.f32 %v220, 1.442695
      %v222 = vpow.pop %v221
      %v223 = vsel %vm170, %v222, 0.0
      %224 = vadd.xlane.f32.xlu0 %v223
      %v225 = vpop.xlane.xlu0 %224
      %v226 = vpack.c.bf16 %v222, %v222
      %227 = vrot.lane.b32.xlu0 %v167, 64
      %v228 = vpop.permute.xlu0 %227
      %v230 = vsel %vm170, %v226, 0
      %vm232 = vcmask 1043456
      %v234 = vsel %vm232, %v228, 0
      %236 = vmatprep.subr.bf16.mxu0 0
      %237 = vmatpush1.bf16.msra.mxu0 %v234
      %238 = vmatprep.subr.bf16.mxu0 0
      %239 = vmatpush1.bf16.msra.mxu0 0
      %240 = vmatprep.subr.bf16.mxu0 0
      %241 = vmatpush1.bf16.msra.mxu0 0
      %242 = vmatprep.subr.bf16.mxu0 0
      %243 = vmatpush1.bf16.msra.mxu0 0
      %244 = vmatprep.subr.bf16.mxu0 0
      %245 = vmatpush1.bf16.msra.mxu0 0
      %246 = vmatprep.subr.bf16.mxu0 0
      %247 = vmatpush1.bf16.msra.mxu0 0
      %248 = vmatprep.subr.bf16.mxu0 0
      %249 = vmatpush1.bf16.msra.mxu0 0
      %250 = vmatprep.subr.bf16.mxu0 0
      %251 = vmatpush1.bf16.msra.mxu0 0
      %252 = vmatprep.subr.bf16.mxu0 0
      %253 = vmatpush1.bf16.msra.mxu0 0
      %254 = vmatprep.subr.bf16.mxu0 0
      %255 = vmatpush1.bf16.msra.mxu0 0
      %256 = vmatprep.subr.bf16.mxu0 0
      %257 = vmatpush1.bf16.msra.mxu0 0
      %258 = vmatprep.subr.bf16.mxu0 0
      %259 = vmatpush1.bf16.msra.mxu0 0
      %260 = vmatprep.subr.bf16.mxu0 0
      %261 = vmatpush1.bf16.msra.mxu0 0
      %262 = vmatprep.subr.bf16.mxu0 0
      %263 = vmatpush1.bf16.msra.mxu0 0
      %264 = vmatprep.subr.bf16.mxu0 0
      %265 = vmatpush1.bf16.msra.mxu0 0
      %266 = vmatprep.subr.bf16.mxu0 0
      %267 = vmatpush1.bf16.msra.mxu0 0
      %268 = vmatprep.mubr.bf16.mxu0 0
      %269 = vmatmul.mubr.bf16.gmra.mrb[0].mxu0 %v230
      %v270 = vpop.f32.mrb[0].mxu0
      %v271 = vadd.f32 0.0, %v270
      %v272 = vpop.f32.mrb[0].mxu0
      %v273 = vpop.f32.mrb[0].mxu0
      %v274 = vpop.f32.mrb[0].mxu0
      %275 = vdwg.mxu0
      %v276 = vrcp.pop %v225
      %v277 = vmul.f32 %v271, %v276
      %279 = vrot.lane.b32.xlu0 %v158, 120
      %v280 = vpop.permute.xlu0 %279
      %281 = vrot.lane.b32.xlu0 %v167, 88
      %v282 = vpop.permute.xlu0 %281
      %v284 = vsel %vm170, %v280, 0
      %v287 = vsel %vm170, %v282, 0
      %289 = vmatprep.subr.bf16.mxu0 0
      %290 = vmatpush1.bf16.xpose.msra.mxu0 %v287
      %291 = vmatprep.subr.bf16.mxu0 0
      %292 = vmatpush1.bf16.xpose.msra.mxu0 0
      %293 = vmatprep.subr.bf16.mxu0 0
      %294 = vmatpush1.bf16.xpose.msra.mxu0 0
      %295 = vmatprep.subr.bf16.mxu0 0
      %296 = vmatpush1.bf16.xpose.msra.mxu0 0
      %297 = vmatprep.subr.bf16.mxu0 0
      %298 = vmatpush1.bf16.xpose.msra.mxu0 0
      %299 = vmatprep.subr.bf16.mxu0 0
      %300 = vmatpush1.bf16.xpose.msra.mxu0 0
      %301 = vmatprep.subr.bf16.mxu0 0
      %302 = vmatpush1.bf16.xpose.msra.mxu0 0
      %303 = vmatprep.subr.bf16.mxu0 0
      %304 = vmatpush1.bf16.xpose.msra.mxu0 0
      %305 = vmatprep.subr.bf16.mxu0 0
      %306 = vmatpush1.bf16.xpose.msra.mxu0 0
      %307 = vmatprep.subr.bf16.mxu0 0
      %308 = vmatpush1.bf16.xpose.msra.mxu0 0
      %309 = vmatprep.subr.bf16.mxu0 0
      %310 = vmatpush1.bf16.xpose.msra.mxu0 0
      %311 = vmatprep.subr.bf16.mxu0 0
      %312 = vmatpush1.bf16.xpose.msra.mxu0 0
      %313 = vmatprep.subr.bf16.mxu0 0
      %314 = vmatpush1.bf16.xpose.msra.mxu0 0
      %315 = vmatprep.subr.bf16.mxu0 0
      %316 = vmatpush1.bf16.xpose.msra.mxu0 0
      %317 = vmatprep.subr.bf16.mxu0 0
      %318 = vmatpush1.bf16.xpose.msra.mxu0 0
      %319 = vmatprep.subr.bf16.mxu0 0
      %320 = vmatpush1.bf16.xpose.msra.mxu0 0
      %321 = vmatprep.mubr.bf16.mxu0 0
      %322 = vmatmul.mubr.bf16.gmra.mrb[0].mxu0 %v284
      %v323 = vpop.f32.mrb[0].mxu0
      %v324 = vadd.f32 %v163, %v323
      %v325 = vpop.f32.mrb[0].mxu0
      %v326 = vpop.f32.mrb[0].mxu0
      %v327 = vpop.f32.mrb[0].mxu0
      %328 = vdwg.mxu0
      %v329 = vsel %vm170, %v324, -inf
      %330 = vmax.xlane.f32.xlu0 %v329
      %v331 = vpop.xlane.xlu0 %330
      %v332 = vsub.f32 %v324, %v331
      %v333 = vmul.f32 %v332, 1.442695
      %v334 = vpow.pop %v333
      %v335 = vsel %vm170, %v334, 0.0
      %336 = vadd.xlane.f32.xlu0 %v335
      %v337 = vpop.xlane.xlu0 %336
      %v338 = vpack.c.bf16 %v334, %v334
      %339 = vrot.lane.b32.xlu0 %v167, 56
      %v340 = vpop.permute.xlu0 %339
      %v342 = vsel %vm170, %v338, 0
      %v345 = vsel %vm232, %v340, 0
      %347 = vmatprep.subr.bf16.mxu0 0
      %348 = vmatpush1.bf16.msra.mxu0 %v345
      %349 = vmatprep.subr.bf16.mxu0 0
      %350 = vmatpush1.bf16.msra.mxu0 0
      %351 = vmatprep.subr.bf16.mxu0 0
      %352 = vmatpush1.bf16.msra.mxu0 0
      %353 = vmatprep.subr.bf16.mxu0 0
      %354 = vmatpush1.bf16.msra.mxu0 0
      %355 = vmatprep.subr.bf16.mxu0 0
      %356 = vmatpush1.bf16.msra.mxu0 0
      %357 = vmatprep.subr.bf16.mxu0 0
      %358 = vmatpush1.bf16.msra.mxu0 0
      %359 = vmatprep.subr.bf16.mxu0 0
      %360 = vmatpush1.bf16.msra.mxu0 0
      %361 = vmatprep.subr.bf16.mxu0 0
      %362 = vmatpush1.bf16.msra.mxu0 0
      %363 = vmatprep.subr.bf16.mxu0 0
      %364 = vmatpush1.bf16.msra.mxu0 0
      %365 = vmatprep.subr.bf16.mxu0 0
      %366 = vmatpush1.bf16.msra.mxu0 0
      %367 = vmatprep.subr.bf16.mxu0 0
      %368 = vmatpush1.bf16.msra.mxu0 0
      %369 = vmatprep.subr.bf16.mxu0 0
      %370 = vmatpush1.bf16.msra.mxu0 0
      %371 = vmatprep.subr.bf16.mxu0 0
      %372 = vmatpush1.bf16.msra.mxu0 0
      %373 = vmatprep.subr.bf16.mxu0 0
      %374 = vmatpush1.bf16.msra.mxu0 0
      %375 = vmatprep.subr.bf16.mxu0 0
      %376 = vmatpush1.bf16.msra.mxu0 0
      %377 = vmatprep.subr.bf16.mxu0 0
      %378 = vmatpush1.bf16.msra.mxu0 0
      %379 = vmatprep.mubr.bf16.mxu0 0
      %380 = vmatmul.mubr.bf16.gmra.mrb[0].mxu0 %v342
      %v381 = vpop.f32.mrb[0].mxu0
      %v382 = vadd.f32 0.0, %v381
      %v383 = vpop.f32.mrb[0].mxu0
      %v384 = vpop.f32.mrb[0].mxu0
      %v385 = vpop.f32.mrb[0].mxu0
      %386 = vdwg.mxu0
      %v387 = vrcp.pop %v337
      %v388 = vmul.f32 %v382, %v387
      %389 = vrot.lane.b32.xlu0 %v158, 112
      %v390 = vpop.permute.xlu0 %389
      %391 = vrot.lane.b32.xlu0 %v167, 80
      %v392 = vpop.permute.xlu0 %391
      %v394 = vsel %vm170, %v390, 0
      %v397 = vsel %vm170, %v392, 0
      %399 = vmatprep.subr.bf16.mxu0 0
      %400 = vmatpush1.bf16.xpose.msra.mxu0 %v397
      %401 = vmatprep.subr.bf16.mxu0 0
      %402 = vmatpush1.bf16.xpose.msra.mxu0 0
      %403 = vmatprep.subr.bf16.mxu0 0
      %404 = vmatpush1.bf16.xpose.msra.mxu0 0
      %405 = vmatprep.subr.bf16.mxu0 0
      %406 = vmatpush1.bf16.xpose.msra.mxu0 0
      %407 = vmatprep.subr.bf16.mxu0 0
      %408 = vmatpush1.bf16.xpose.msra.mxu0 0
      %409 = vmatprep.subr.bf16.mxu0 0
      %410 = vmatpush1.bf16.xpose.msra.mxu0 0
      %411 = vmatprep.subr.bf16.mxu0 0
      %412 = vmatpush1.bf16.xpose.msra.mxu0 0
      %413 = vmatprep.subr.bf16.mxu0 0
      %414 = vmatpush1.bf16.xpose.msra.mxu0 0
      %415 = vmatprep.subr.bf16.mxu0 0
      %416 = vmatpush1.bf16.xpose.msra.mxu0 0
      %417 = vmatprep.subr.bf16.mxu0 0
      %418 = vmatpush1.bf16.xpose.msra.mxu0 0
      %419 = vmatprep.subr.bf16.mxu0 0
      %420 = vmatpush1.bf16.xpose.msra.mxu0 0
      %421 = vmatprep.subr.bf16.mxu0 0
      %422 = vmatpush1.bf16.xpose.msra.mxu0 0
      %423 = vmatprep.subr.bf16.mxu0 0
      %424 = vmatpush1.bf16.xpose.msra.mxu0 0
      %425 = vmatprep.subr.bf16.mxu0 0
      %426 = vmatpush1.bf16.xpose.msra.mxu0 0
      %427 = vmatprep.subr.bf16.mxu0 0
      %428 = vmatpush1.bf16.xpose.msra.mxu0 0
      %429 = vmatprep.subr.bf16.mxu0 0
      %430 = vmatpush1.bf16.xpose.msra.mxu0 0
      %431 = vmatprep.mubr.bf16.mxu0 0
      %432 = vmatmul.mubr.bf16.gmra.mrb[0].mxu0 %v394
      %v433 = vpop.f32.mrb[0].mxu0
      %v434 = vadd.f32 %v163, %v433
      %v435 = vpop.f32.mrb[0].mxu0
      %v436 = vpop.f32.mrb[0].mxu0
      %v437 = vpop.f32.mrb[0].mxu0
      %438 = vdwg.mxu0
      %v439 = vsel %vm170, %v434, -inf
      %440 = vmax.xlane.f32.xlu0 %v439
      %v441 = vpop.xlane.xlu0 %440
      %v442 = vsub.f32 %v434, %v441
      %v443 = vmul.f32 %v442, 1.442695
      %v444 = vpow.pop %v443
      %v445 = vsel %vm170, %v444, 0.0
      %446 = vadd.xlane.f32.xlu0 %v445
      %v447 = vpop.xlane.xlu0 %446
      %v448 = vpack.c.bf16 %v444, %v444
      %449 = vrot.lane.b32.xlu0 %v167, 48
      %v450 = vpop.permute.xlu0 %449
      %v452 = vsel %vm170, %v448, 0
      %v455 = vsel %vm232, %v450, 0
      %457 = vmatprep.subr.bf16.mxu0 0
      %458 = vmatpush1.bf16.msra.mxu0 %v455
      %459 = vmatprep.subr.bf16.mxu0 0
      %460 = vmatpush1.bf16.msra.mxu0 0
      %461 = vmatprep.subr.bf16.mxu0 0
      %462 = vmatpush1.bf16.msra.mxu0 0
      %463 = vmatprep.subr.bf16.mxu0 0
      %464 = vmatpush1.bf16.msra.mxu0 0
      %465 = vmatprep.subr.bf16.mxu0 0
      %466 = vmatpush1.bf16.msra.mxu0 0
      %467 = vmatprep.subr.bf16.mxu0 0
      %468 = vmatpush1.bf16.msra.mxu0 0
      %469 = vmatprep.subr.bf16.mxu0 0
      %470 = vmatpush1.bf16.msra.mxu0 0
      %471 = vmatprep.subr.bf16.mxu0 0
      %472 = vmatpush1.bf16.msra.mxu0 0
      %473 = vmatprep.subr.bf16.mxu0 0
      %474 = vmatpush1.bf16.msra.mxu0 0
      %475 = vmatprep.subr.bf16.mxu0 0
      %476 = vmatpush1.bf16.msra.mxu0 0
      %477 = vmatprep.subr.bf16.mxu0 0
      %478 = vmatpush1.bf16.msra.mxu0 0
      %479 = vmatprep.subr.bf16.mxu0 0
      %480 = vmatpush1.bf16.msra.mxu0 0
      %481 = vmatprep.subr.bf16.mxu0 0
      %482 = vmatpush1.bf16.msra.mxu0 0
      %483 = vmatprep.subr.bf16.mxu0 0
      %484 = vmatpush1.bf16.msra.mxu0 0
      %485 = vmatprep.subr.bf16.mxu0 0
      %486 = vmatpush1.bf16.msra.mxu0 0
      %487 = vmatprep.subr.bf16.mxu0 0
      %488 = vmatpush1.bf16.msra.mxu0 0
      %489 = vmatprep.mubr.bf16.mxu0 0
      %490 = vmatmul.mubr.bf16.gmra.mrb[0].mxu0 %v452
      %v491 = vpop.f32.mrb[0].mxu0
      %v492 = vadd.f32 0.0, %v491
      %v493 = vpop.f32.mrb[0].mxu0
      %v494 = vpop.f32.mrb[0].mxu0
      %v495 = vpop.f32.mrb[0].mxu0
      %496 = vdwg.mxu0
      %v497 = vrcp.pop %v447
      %v498 = vmul.f32 %v492, %v497
      %499 = vrot.lane.b32.xlu0 %v158, 104
      %v500 = vpop.permute.xlu0 %499
      %501 = vrot.lane.b32.xlu0 %v167, 72
      %v502 = vpop.permute.xlu0 %501
      %v504 = vsel %vm170, %v500, 0
      %v507 = vsel %vm170, %v502, 0
      %509 = vmatprep.subr.bf16.mxu0 0
      %510 = vmatpush1.bf16.xpose.msra.mxu0 %v507
      %511 = vmatprep.subr.bf16.mxu0 0
      %512 = vmatpush1.bf16.xpose.msra.mxu0 0
      %513 = vmatprep.subr.bf16.mxu0 0
      %514 = vmatpush1.bf16.xpose.msra.mxu0 0
      %515 = vmatprep.subr.bf16.mxu0 0
      %516 = vmatpush1.bf16.xpose.msra.mxu0 0
      %517 = vmatprep.subr.bf16.mxu0 0
      %518 = vmatpush1.bf16.xpose.msra.mxu0 0
      %519 = vmatprep.subr.bf16.mxu0 0
      %520 = vmatpush1.bf16.xpose.msra.mxu0 0
      %521 = vmatprep.subr.bf16.mxu0 0
      %522 = vmatpush1.bf16.xpose.msra.mxu0 0
      %523 = vmatprep.subr.bf16.mxu0 0
      %524 = vmatpush1.bf16.xpose.msra.mxu0 0
      %525 = vmatprep.subr.bf16.mxu0 0
      %526 = vmatpush1.bf16.xpose.msra.mxu0 0
      %527 = vmatprep.subr.bf16.mxu0 0
      %528 = vmatpush1.bf16.xpose.msra.mxu0 0
      %529 = vmatprep.subr.bf16.mxu0 0
      %530 = vmatpush1.bf16.xpose.msra.mxu0 0
      %531 = vmatprep.subr.bf16.mxu0 0
      %532 = vmatpush1.bf16.xpose.msra.mxu0 0
      %533 = vmatprep.subr.bf16.mxu0 0
      %534 = vmatpush1.bf16.xpose.msra.mxu0 0
      %535 = vmatprep.subr.bf16.mxu0 0
      %536 = vmatpush1.bf16.xpose.msra.mxu0 0
      %537 = vmatprep.subr.bf16.mxu0 0
      %538 = vmatpush1.bf16.xpose.msra.mxu0 0
      %539 = vmatprep.subr.bf16.mxu0 0
      %540 = vmatpush1.bf16.xpose.msra.mxu0 0
      %541 = vmatprep.mubr.bf16.mxu0 0
      %542 = vmatmul.mubr.bf16.gmra.mrb[0].mxu0 %v504
      %v543 = vpop.f32.mrb[0].mxu0
      %v544 = vadd.f32 %v163, %v543
      %v545 = vpop.f32.mrb[0].mxu0
      %v546 = vpop.f32.mrb[0].mxu0
      %v547 = vpop.f32.mrb[0].mxu0
      %548 = vdwg.mxu0
      %v549 = vsel %vm170, %v544, -inf
      %550 = vmax.xlane.f32.xlu0 %v549
      %v551 = vpop.xlane.xlu0 %550
      %v552 = vsub.f32 %v544, %v551
      %v553 = vmul.f32 %v552, 1.442695
      %v554 = vpow.pop %v553
      %v555 = vsel %vm170, %v554, 0.0
      %556 = vadd.xlane.f32.xlu0 %v555
      %v557 = vpop.xlane.xlu0 %556
      %v558 = vpack.c.bf16 %v554, %v554
      %559 = vrot.lane.b32.xlu0 %v167, 40
      %v560 = vpop.permute.xlu0 %559
      %v562 = vsel %vm170, %v558, 0
      %v565 = vsel %vm232, %v560, 0
      %567 = vmatprep.subr.bf16.mxu0 0
      %568 = vmatpush1.bf16.msra.mxu0 %v565
      %569 = vmatprep.subr.bf16.mxu0 0
      %570 = vmatpush1.bf16.msra.mxu0 0
      %571 = vmatprep.subr.bf16.mxu0 0
      %572 = vmatpush1.bf16.msra.mxu0 0
      %573 = vmatprep.subr.bf16.mxu0 0
      %574 = vmatpush1.bf16.msra.mxu0 0
      %575 = vmatprep.subr.bf16.mxu0 0
      %576 = vmatpush1.bf16.msra.mxu0 0
      %577 = vmatprep.subr.bf16.mxu0 0
      %578 = vmatpush1.bf16.msra.mxu0 0
      %579 = vmatprep.subr.bf16.mxu0 0
      %580 = vmatpush1.bf16.msra.mxu0 0
      %581 = vmatprep.subr.bf16.mxu0 0
      %582 = vmatpush1.bf16.msra.mxu0 0
      %583 = vmatprep.subr.bf16.mxu0 0
      %584 = vmatpush1.bf16.msra.mxu0 0
      %585 = vmatprep.subr.bf16.mxu0 0
      %586 = vmatpush1.bf16.msra.mxu0 0
      %587 = vmatprep.subr.bf16.mxu0 0
      %588 = vmatpush1.bf16.msra.mxu0 0
      %589 = vmatprep.subr.bf16.mxu0 0
      %590 = vmatpush1.bf16.msra.mxu0 0
      %591 = vmatprep.subr.bf16.mxu0 0
      %592 = vmatpush1.bf16.msra.mxu0 0
      %593 = vmatprep.subr.bf16.mxu0 0
      %594 = vmatpush1.bf16.msra.mxu0 0
      %595 = vmatprep.subr.bf16.mxu0 0
      %596 = vmatpush1.bf16.msra.mxu0 0
      %597 = vmatprep.subr.bf16.mxu0 0
      %598 = vmatpush1.bf16.msra.mxu0 0
      %599 = vmatprep.mubr.bf16.mxu0 0
      %600 = vmatmul.mubr.bf16.gmra.mrb[0].mxu0 %v562
      %v601 = vpop.f32.mrb[0].mxu0
      %v602 = vadd.f32 0.0, %v601
      %v603 = vpop.f32.mrb[0].mxu0
      %v604 = vpop.f32.mrb[0].mxu0
      %v605 = vpop.f32.mrb[0].mxu0
      %606 = vdwg.mxu0
      %v607 = vrcp.pop %v557
      %v608 = vmul.f32 %v602, %v607
      %610 = vrot.lane.b32.xlu0 %v388, 8
      %v611 = vpop.permute.xlu0 %610
      %614 = vrot.lane.b32.xlu0 %v498, 16
      %v615 = vpop.permute.xlu0 %614
      %618 = vrot.lane.b32.xlu0 %v608, 24
      %v619 = vpop.permute.xlu0 %618
      %v621 = vsel %vm170, %v277, %v611
      %vm622 = vcmask 130048
      %v623 = vsel %vm622, %v621, %v615
      %vm624 = vcmask 195584
      %v625 = vsel %vm624, %v623, %v619
      %v626 = vpack.c.bf16 %v625, %v625
      %vm627 = vcmask 257024
      %628 = vst.msk [vmem:[%s152] sm:$0xf] %vm627, %v626
      %p629 = scmp.lt.s32.totalorder %s13, 1
      %s630 = scalar_select %p629, %s13, 1
      %s631 = smul.addr %s630, 4
      %s632 = scalar_lea.vmem %s2, %s631
      // Predicated region
      $region29: #{text_forward.14} parent=27 // pred_check
        %p633 = pneg %p83
      $region30: #{text_forward.14} parent=27 // pred_check_branch
        %635 = sbr.rel (%p633) target = $region32
      $region31: #{text_forward.14} parent=27 // pred_region
        _
      $region32: #{text_forward.14} parent=27 // pred_fallthru
        _
    $region28: #{text_forward.14} parent=5 // pred_fallthru
      _
    %p636 = scmp.le.s32.totalorder 2, %s8
    // Predicated region
    $region33: #{text_forward.14} parent=5 // pred_check
      %p637 = pneg %p636
    $region34: #{text_forward.14} parent=5 // pred_check_branch
      %639 = sbr.rel (%p637) target = $region36
    $region35: #{text_forward.14} parent=5 // pred_region
      %s640 = ssub.s32 %s8, 2
      // Predicated region
      $region37: #{text_forward.14} parent=35 // pred_check
        %p641 = pneg %p89
      $region38: #{text_forward.14} parent=35 // pred_check_branch
        %643 = sbr.rel (%p641) target = $region40
      $region39: #{text_forward.14} parent=35 // pred_region
        %p644 = scmp.lt.s32.totalorder %s14, 1
        %s645 = scalar_select %p644, %s14, 1
        %s646 = smul.addr %s645, 4
        %s647 = scalar_lea.vmem %s2, %s646
      $region40: #{text_forward.14} parent=35 // pred_fallthru
        _
    $region36: #{text_forward.14} parent=5 // pred_fallthru
      _
  $region6: #{text_forward.14} parent=0 // loop_footer
    %s12 = sadd.s32 1, %s8
  $region7: #{text_forward.14} parent=0 // loop_footer_branch
    %7 = sbr.rel target = $region3
  $region8: #{text_forward.14} parent=0 // loop_exit
    _

// kernel: text_forward.16
$region0: #{text_forward.16}
  #allocation0 [shape = 'u32[]', space=smem, size = 0x4, offset = 0x4, fixed_abs, tag = 'smem constant byte address 0x4 - core index']
  #allocation1 [shape = 'u32[144,128]{1,0:T(1,128)}', space=vmem, size = 0x12000, scoped, tag = 'internal scratch']
  %s0 = inlined_call_operand.vmem [shape: bf16[16,32], index: 0, kind: input, shape index: {}]
  %s1 = inlined_call_operand.vmem [shape: bf16[32,64], index: 1, kind: input, shape index: {}]
  %s2 = inlined_call_operand.vmem [shape: f32[1,64], index: 2, kind: input, shape index: {}]
  %s3 = inlined_call_operand.vmem [shape: bf16[16,64], index: 3, kind: output, shape index: {}]
  %s4 = sld [smem:[#allocation0]]
  $region22: #{text_forward.16} parent=0
    _
  %s6 = ssub.s32 1, %s4
  %s7 = scalar_select 0, %s6, %s4
  // Predicated region
  $region2: #{text_forward.16} parent=0 // pred_check
    _
  $region3: #{text_forward.16} parent=0 // pred_check_branch
    %9 = sbr.rel (0) target = $region5
  $region4: #{text_forward.16} parent=0 // pred_region
    _
  $region5: #{text_forward.16} parent=0 // pred_fallthru
    _
  // Predicated region
  $region6: #{text_forward.16} parent=0 // pred_check
    _
  $region7: #{text_forward.16} parent=0 // pred_check_branch
    %11 = sbr.rel (0) target = $region9
  $region8: #{text_forward.16} parent=0 // pred_region
    _
  $region9: #{text_forward.16} parent=0 // pred_fallthru
    _
  // Predicated region
  $region10: #{text_forward.16} parent=0 // pred_check
    _
  $region11: #{text_forward.16} parent=0 // pred_check_branch
    %13 = sbr.rel (0) target = $region13
  $region12: #{text_forward.16} parent=0 // pred_region
    _
  $region13: #{text_forward.16} parent=0 // pred_fallthru
    _
  %v15 = vld [vmem:[%s0] sm:$0xf]
  %v16 = vld [vmem:[%s0 + $0x4] sm:$0xf]
  %v17 = vld [vmem:[%s1] sm:$0xf]
  %v18 = vld [vmem:[%s1 + $0x4] sm:$0xf]
  %v19 = vld [vmem:[%s1 + $0x8] sm:$0xf]
  %v20 = vld [vmem:[%s1 + $0xc] sm:$0xf]
  %v21 = vld [vmem:[%s2] sm:$0x1]
  %v23 = vlaneseq
  %v24 = vshrl.u32 %v23, 7
  %v25 = vsub.s32 0, %v24
  %v26 = vrot.slane %v21, %v25
  %v30 = vunpack.c.l.b16 %v15
  %v31 = vunpack.c.l.b16 %v16
  %v32 = vpack.c.b16 %v31, %v30
  %v37 = vunpack.c.l.b16 %v17
  %v38 = vunpack.c.l.b16 %v18
  %v39 = vunpack.c.l.b16 %v19
  %v40 = vunpack.c.l.b16 %v20
  %v41 = vpack.c.b16 %v38, %v37
  %v42 = vpack.c.b16 %v40, %v39
  %vm45 = vcmask 261120
  %v47 = vsel %vm45, %v32, 0
  %49 = vmatprep.subr.bf16.mxu0 0
  %50 = vmatpush1.bf16.msra.mxu0 %v41
  %51 = vmatprep.subr.bf16.mxu0 0
  %52 = vmatpush1.bf16.msra.mxu0 %v42
  %53 = vmatprep.subr.bf16.mxu0 0
  %54 = vmatpush1.bf16.msra.mxu0 0
  %55 = vmatprep.subr.bf16.mxu0 0
  %56 = vmatpush1.bf16.msra.mxu0 0
  %57 = vmatprep.subr.bf16.mxu0 0
  %58 = vmatpush1.bf16.msra.mxu0 0
  %59 = vmatprep.subr.bf16.mxu0 0
  %60 = vmatpush1.bf16.msra.mxu0 0
  %61 = vmatprep.subr.bf16.mxu0 0
  %62 = vmatpush1.bf16.msra.mxu0 0
  %63 = vmatprep.subr.bf16.mxu0 0
  %64 = vmatpush1.bf16.msra.mxu0 0
  %65 = vmatprep.subr.bf16.mxu0 0
  %66 = vmatpush1.bf16.msra.mxu0 0
  %67 = vmatprep.subr.bf16.mxu0 0
  %68 = vmatpush1.bf16.msra.mxu0 0
  %69 = vmatprep.subr.bf16.mxu0 0
  %70 = vmatpush1.bf16.msra.mxu0 0
  %71 = vmatprep.subr.bf16.mxu0 0
  %72 = vmatpush1.bf16.msra.mxu0 0
  %73 = vmatprep.subr.bf16.mxu0 0
  %74 = vmatpush1.bf16.msra.mxu0 0
  %75 = vmatprep.subr.bf16.mxu0 0
  %76 = vmatpush1.bf16.msra.mxu0 0
  %77 = vmatprep.subr.bf16.mxu0 0
  %78 = vmatpush1.bf16.msra.mxu0 0
  %79 = vmatprep.subr.bf16.mxu0 0
  %80 = vmatpush1.bf16.msra.mxu0 0
  %81 = vmatprep.mubr.bf16.mxu0 0
  %82 = vmatmul.mubr.bf16.gmra.mrb[0].mxu0 %v47
  %v83 = vpop.f32.mrb[0].mxu0
  %v84 = vadd.f32 %v26, %v83
  %v85 = vpop.f32.mrb[0].mxu0
  %v86 = vpop.f32.mrb[0].mxu0
  %v87 = vadd.f32 %v26, %v86
  %v88 = vpop.f32.mrb[0].mxu0
  %89 = vdwg.mxu0
  %v90 = vmul.f32 %v84, 0.5
  %v91 = vmul.f32 %v87, 0.5
  %v92 = vmul.f32 %v84, 0.044715
  %v93 = vmul.f32 %v87, 0.044715
  %v94 = vmul.f32 %v92, %v84
  %v95 = vmul.f32 %v93, %v87
  %v96 = vmul.f32 %v94, %v84
  %v97 = vmul.f32 %v95, %v87
  %v98 = vadd.f32 %v84, %v96
  %v99 = vadd.f32 %v87, %v97
  %v100 = vmul.f32 %v98, 0.7978846
  %v101 = vmul.f32 %v99, 0.7978846
  %v102 = vtanh.pop %v100
  %v103 = vtanh.pop %v101
  %v104 = vadd.f32 %v102, 1.0
  %v105 = vadd.f32 %v103, 1.0
  %v106 = vmul.f32 %v90, %v104
  %v107 = vmul.f32 %v91, %v105
  %v108 = vpack.c.bf16 %v107, %v106
  %v110 = vunpack.c.l.b16 %v108
  %v111 = vunpack.c.h.b16 %v108
  %v112 = vpack.c.b16 %v110, %v110
  %v113 = vpack.c.b16 %v111, %v111
  %vm116 = vcmask 519168
  %117 = vst.msk [vmem:[%s3] sm:$0xf] %vm116, %v112
  %118 = vst.msk [vmem:[%s3 + $0x4] sm:$0xf] %vm116, %v113
  // Predicated region
  $region14: #{text_forward.16} parent=0 // pred_check
    _
  $region15: #{text_forward.16} parent=0 // pred_check_branch
    %120 = sbr.rel (0) target = $region17
  $region16: #{text_forward.16} parent=0 // pred_region
    _
  $region17: #{text_forward.16} parent=0 // pred_fallthru
    _
  // Predicated region
  $region18: #{text_forward.16} parent=0 // pred_check
    _
  $region19: #{text_forward.16} parent=0 // pred_check_branch
    %122 = sbr.rel (0) target = $region21
  $region20: #{text_forward.16} parent=0 // pred_region
    _
  $region21: #{text_forward.16} parent=0 // pred_fallthru
    _

// kernel: text_forward.23
$region0: #{text_forward.23}
  #allocation0 [shape = 'u32[]', space=smem, size = 0x4, offset = 0x4, fixed_abs, tag = 'smem constant byte address 0x4 - core index']
  #allocation1 [shape = 'u32[144,128]{1,0:T(1,128)}', space=vmem, size = 0x12000, scoped, tag = 'internal scratch']
  %s0 = inlined_call_operand.vmem [shape: bf16[2,32], index: 0, kind: input, shape index: {}]
  %s1 = inlined_call_operand.vmem [shape: bf16[32,128], index: 1, kind: input, shape index: {}]
  %s2 = inlined_call_operand.vmem [shape: f32[1,128], index: 2, kind: input, shape index: {}]
  %s3 = inlined_call_operand.vmem [shape: f32[2,128], index: 3, kind: output, shape index: {}]
  %s4 = sld [smem:[#allocation0]]
  $region22: #{text_forward.23} parent=0
    _
  %s6 = ssub.s32 1, %s4
  %s7 = scalar_select 0, %s6, %s4
  // Predicated region
  $region2: #{text_forward.23} parent=0 // pred_check
    _
  $region3: #{text_forward.23} parent=0 // pred_check_branch
    %9 = sbr.rel (0) target = $region5
  $region4: #{text_forward.23} parent=0 // pred_region
    _
  $region5: #{text_forward.23} parent=0 // pred_fallthru
    _
  // Predicated region
  $region6: #{text_forward.23} parent=0 // pred_check
    _
  $region7: #{text_forward.23} parent=0 // pred_check_branch
    %11 = sbr.rel (0) target = $region9
  $region8: #{text_forward.23} parent=0 // pred_region
    _
  $region9: #{text_forward.23} parent=0 // pred_fallthru
    _
  // Predicated region
  $region10: #{text_forward.23} parent=0 // pred_check
    _
  $region11: #{text_forward.23} parent=0 // pred_check_branch
    %13 = sbr.rel (0) target = $region13
  $region12: #{text_forward.23} parent=0 // pred_region
    _
  $region13: #{text_forward.23} parent=0 // pred_fallthru
    _
  %v15 = vld [vmem:[%s0] sm:$0x1]
  %v16 = vld [vmem:[%s1] sm:$0xf]
  %v17 = vld [vmem:[%s1 + $0x4] sm:$0xf]
  %v18 = vld [vmem:[%s1 + $0x8] sm:$0xf]
  %v19 = vld [vmem:[%s1 + $0xc] sm:$0xf]
  %v20 = vld [vmem:[%s2] sm:$0x1]
  %v22 = vlaneseq
  %v23 = vshrl.u32 %v22, 7
  %v24 = vsub.s32 0, %v23
  %v25 = vrot.slane %v20, %v24
  %v31 = vunpack.c.l.b16 %v16
  %v32 = vunpack.c.l.b16 %v17
  %v33 = vunpack.c.l.b16 %v18
  %v34 = vunpack.c.l.b16 %v19
  %v35 = vpack.c.b16 %v32, %v31
  %v36 = vpack.c.b16 %v34, %v33
  %vm39 = vcmask 261120
  %v41 = vsel %vm39, %v15, 0
  %43 = vmatprep.subr.bf16.mxu0 0
  %44 = vmatpush1.bf16.msra.mxu0 %v35
  %45 = vmatprep.subr.bf16.mxu0 0
  %46 = vmatpush1.bf16.msra.mxu0 %v36
  %47 = vmatprep.subr.bf16.mxu0 0
  %48 = vmatpush1.bf16.msra.mxu0 0
  %49 = vmatprep.subr.bf16.mxu0 0
  %50 = vmatpush1.bf16.msra.mxu0 0
  %51 = vmatprep.subr.bf16.mxu0 0
  %52 = vmatpush1.bf16.msra.mxu0 0
  %53 = vmatprep.subr.bf16.mxu0 0
  %54 = vmatpush1.bf16.msra.mxu0 0
  %55 = vmatprep.subr.bf16.mxu0 0
  %56 = vmatpush1.bf16.msra.mxu0 0
  %57 = vmatprep.subr.bf16.mxu0 0
  %58 = vmatpush1.bf16.msra.mxu0 0
  %59 = vmatprep.subr.bf16.mxu0 0
  %60 = vmatpush1.bf16.msra.mxu0 0
  %61 = vmatprep.subr.bf16.mxu0 0
  %62 = vmatpush1.bf16.msra.mxu0 0
  %63 = vmatprep.subr.bf16.mxu0 0
  %64 = vmatpush1.bf16.msra.mxu0 0
  %65 = vmatprep.subr.bf16.mxu0 0
  %66 = vmatpush1.bf16.msra.mxu0 0
  %67 = vmatprep.subr.bf16.mxu0 0
  %68 = vmatpush1.bf16.msra.mxu0 0
  %69 = vmatprep.subr.bf16.mxu0 0
  %70 = vmatpush1.bf16.msra.mxu0 0
  %71 = vmatprep.subr.bf16.mxu0 0
  %72 = vmatpush1.bf16.msra.mxu0 0
  %73 = vmatprep.subr.bf16.mxu0 0
  %74 = vmatpush1.bf16.msra.mxu0 0
  %75 = vmatprep.mubr.bf16.mxu0 0
  %76 = vmatmul.mubr.bf16.gmra.mrb[0].mxu0 %v41
  %v77 = vpop.f32.mrb[0].mxu0
  %v78 = vadd.f32 %v25, %v77
  %v79 = vpop.f32.mrb[0].mxu0
  %v80 = vpop.f32.mrb[0].mxu0
  %v81 = vpop.f32.mrb[0].mxu0
  %82 = vdwg.mxu0
  %83 = vst [vmem:[%s3] sm:$0x3] %v78
  // Predicated region
  $region14: #{text_forward.23} parent=0 // pred_check
    _
  $region15: #{text_forward.23} parent=0 // pred_check_branch
    %85 = sbr.rel (0) target = $region17
  $region16: #{text_forward.23} parent=0 // pred_region
    _
  $region17: #{text_forward.23} parent=0 // pred_fallthru
    _
  // Predicated region
  $region18: #{text_forward.23} parent=0 // pred_check
    _
  $region19: #{text_forward.23} parent=0 // pred_check_branch
    %87 = sbr.rel (0) target = $region21
  $region20: #{text_forward.23} parent=0 // pred_region
    _
  $region21: #{text_forward.23} parent=0 // pred_fallthru
    _

// kernel: text_forward.17
$region0: #{text_forward.17}
  #allocation0 [shape = 'u32[]', space=smem, size = 0x4, offset = 0x4, fixed_abs, tag = 'smem constant byte address 0x4 - core index']
  #allocation1 [shape = 'u32[144,128]{1,0:T(1,128)}', space=vmem, size = 0x12000, scoped, tag = 'internal scratch']
  %s0 = inlined_call_operand.vmem [shape: bf16[16,64], index: 0, kind: input, shape index: {}]
  %s1 = inlined_call_operand.vmem [shape: bf16[64,32], index: 1, kind: input, shape index: {}]
  %s2 = inlined_call_operand.vmem [shape: f32[1,32], index: 2, kind: input, shape index: {}]
  %s3 = inlined_call_operand.vmem [shape: bf16[16,32], index: 3, kind: input, shape index: {}]
  %s4 = inlined_call_operand.vmem [shape: f32[1,32], index: 4, kind: input, shape index: {}]
  %s5 = inlined_call_operand.vmem [shape: f32[1,32], index: 5, kind: input, shape index: {}]
  %s6 = inlined_call_operand.vmem [shape: bf16[16,32], index: 6, kind: output, shape index: {}]
  %s7 = sld [smem:[#allocation0]]
  $region34: #{text_forward.17} parent=0
    _
  %s9 = ssub.s32 1, %s7
  %s10 = scalar_select 0, %s9, %s7
  // Predicated region
  $region2: #{text_forward.17} parent=0 // pred_check
    _
  $region3: #{text_forward.17} parent=0 // pred_check_branch
    %12 = sbr.rel (0) target = $region5
  $region4: #{text_forward.17} parent=0 // pred_region
    _
  $region5: #{text_forward.17} parent=0 // pred_fallthru
    _
  // Predicated region
  $region6: #{text_forward.17} parent=0 // pred_check
    _
  $region7: #{text_forward.17} parent=0 // pred_check_branch
    %14 = sbr.rel (0) target = $region9
  $region8: #{text_forward.17} parent=0 // pred_region
    _
  $region9: #{text_forward.17} parent=0 // pred_fallthru
    _
  // Predicated region
  $region10: #{text_forward.17} parent=0 // pred_check
    _
  $region11: #{text_forward.17} parent=0 // pred_check_branch
    %16 = sbr.rel (0) target = $region13
  $region12: #{text_forward.17} parent=0 // pred_region
    _
  $region13: #{text_forward.17} parent=0 // pred_fallthru
    _
  // Predicated region
  $region14: #{text_forward.17} parent=0 // pred_check
    _
  $region15: #{text_forward.17} parent=0 // pred_check_branch
    %18 = sbr.rel (0) target = $region17
  $region16: #{text_forward.17} parent=0 // pred_region
    _
  $region17: #{text_forward.17} parent=0 // pred_fallthru
    _
  // Predicated region
  $region18: #{text_forward.17} parent=0 // pred_check
    _
  $region19: #{text_forward.17} parent=0 // pred_check_branch
    %20 = sbr.rel (0) target = $region21
  $region20: #{text_forward.17} parent=0 // pred_region
    _
  $region21: #{text_forward.17} parent=0 // pred_fallthru
    _
  // Predicated region
  $region22: #{text_forward.17} parent=0 // pred_check
    _
  $region23: #{text_forward.17} parent=0 // pred_check_branch
    %22 = sbr.rel (0) target = $region25
  $region24: #{text_forward.17} parent=0 // pred_region
    _
  $region25: #{text_forward.17} parent=0 // pred_fallthru
    _
  %v24 = vld [vmem:[%s0] sm:$0xf]
  %v25 = vld [vmem:[%s0 + $0x4] sm:$0xf]
  %v26 = vld [vmem:[%s1] sm:$0xf]
  %v27 = vld [vmem:[%s1 + $0x4] sm:$0xf]
  %v28 = vld [vmem:[%s1 + $0x8] sm:$0xf]
  %v29 = vld [vmem:[%s1 + $0xc] sm:$0xf]
  %v30 = vld [vmem:[%s1 + $0x10] sm:$0xf]
  %v31 = vld [vmem:[%s1 + $0x14] sm:$0xf]
  %v32 = vld [vmem:[%s1 + $0x18] sm:$0xf]
  %v33 = vld [vmem:[%s1 + $0x1c] sm:$0xf]
  %v34 = vld [vmem:[%s2] sm:$0x1]
  %v36 = vlaneseq
  %v37 = vshrl.u32 %v36, 7
  %v38 = vsub.s32 0, %v37
  %v39 = vrot.slane %v34, %v38
  %v43 = vunpack.c.l.b16 %v24
  %v44 = vunpack.c.l.b16 %v25
  %v45 = vpack.c.b16 %v44, %v43
  %v54 = vunpack.c.l.b16 %v26
  %v55 = vunpack.c.l.b16 %v27
  %v56 = vunpack.c.l.b16 %v28
  %v57 = vunpack.c.l.b16 %v29
  %v58 = vunpack.c.l.b16 %v30
  %v59 = vunpack.c.l.b16 %v31
  %v60 = vunpack.c.l.b16 %v32
  %v61 = vunpack.c.l.b16 %v33
  %v62 = vpack.c.b16 %v55, %v54
  %v63 = vpack.c.b16 %v57, %v56
  %v64 = vpack.c.b16 %v59, %v58
  %v65 = vpack.c.b16 %v61, %v60
  %vm70 = vcmask 523264
  %v72 = vsel %vm70, %v45, 0
  %74 = vmatprep.subr.bf16.mxu0 0
  %75 = vmatpush1.bf16.msra.mxu0 %v62
  %76 = vmatprep.subr.bf16.mxu0 0
  %77 = vmatpush1.bf16.msra.mxu0 %v63
  %78 = vmatprep.subr.bf16.mxu0 0
  %79 = vmatpush1.bf16.msra.mxu0 %v64
  %80 = vmatprep.subr.bf16.mxu0 0
  %81 = vmatpush1.bf16.msra.mxu0 %v65
  %82 = vmatprep.subr.bf16.mxu0 0
  %83 = vmatpush1.bf16.msra.mxu0 0
  %84 = vmatprep.subr.bf16.mxu0 0
  %85 = vmatpush1.bf16.msra.mxu0 0
  %86 = vmatprep.subr.bf16.mxu0 0
  %87 = vmatpush1.bf16.msra.mxu0 0
  %88 = vmatprep.subr.bf16.mxu0 0
  %89 = vmatpush1.bf16.msra.mxu0 0
  %90 = vmatprep.subr.bf16.mxu0 0
  %91 = vmatpush1.bf16.msra.mxu0 0
  %92 = vmatprep.subr.bf16.mxu0 0
  %93 = vmatpush1.bf16.msra.mxu0 0
  %94 = vmatprep.subr.bf16.mxu0 0
  %95 = vmatpush1.bf16.msra.mxu0 0
  %96 = vmatprep.subr.bf16.mxu0 0
  %97 = vmatpush1.bf16.msra.mxu0 0
  %98 = vmatprep.subr.bf16.mxu0 0
  %99 = vmatpush1.bf16.msra.mxu0 0
  %100 = vmatprep.subr.bf16.mxu0 0
  %101 = vmatpush1.bf16.msra.mxu0 0
  %102 = vmatprep.subr.bf16.mxu0 0
  %103 = vmatpush1.bf16.msra.mxu0 0
  %104 = vmatprep.subr.bf16.mxu0 0
  %105 = vmatpush1.bf16.msra.mxu0 0
  %106 = vmatprep.mubr.bf16.mxu0 0
  %107 = vmatmul.mubr.bf16.gmra.mrb[0].mxu0 %v72
  %v108 = vpop.f32.mrb[0].mxu0
  %v109 = vadd.f32 %v39, %v108
  %v110 = vpop.f32.mrb[0].mxu0
  %v111 = vpop.f32.mrb[0].mxu0
  %v112 = vadd.f32 %v39, %v111
  %v113 = vpop.f32.mrb[0].mxu0
  %114 = vdwg.mxu0
  %v115 = vld [vmem:[%s3] sm:$0xf]
  %v116 = vld [vmem:[%s3 + $0x4] sm:$0xf]
  %v117 = vunpack.c.l.bf16 %v115
  %v118 = vunpack.c.l.bf16 %v116
  %v119 = vadd.f32 %v109, %v117
  %v120 = vadd.f32 %v112, %v118
  %vm121 = vcmask 261120
  %v122 = vsel %vm121, %v119, 0.0
  %123 = vadd.xlane.f32.xlu0 %v122
  %v124 = vpop.xlane.xlu0 %123
  %v125 = vsel %vm121, %v120, 0.0
  %126 = vadd.xlane.f32.xlu0 %v125
  %v127 = vpop.xlane.xlu0 %126
  %v128 = vrcp.pop 32.0
  %v129 = vmul.f32 %v124, %v128
  %v130 = vmul.f32 %v127, %v128
  %v131 = vsub.f32 %v119, %v129
  %v132 = vsub.f32 %v120, %v130
  %v133 = vmul.f32 %v131, %v131
  %v134 = vmul.f32 %v132, %v132
  %v135 = vsel %vm121, %v133, 0.0
  %136 = vadd.xlane.f32.xlu0 %v135
  %v137 = vpop.xlane.xlu0 %136
  %v138 = vsel %vm121, %v134, 0.0
  %139 = vadd.xlane.f32.xlu0 %v138
  %v140 = vpop.xlane.xlu0 %139
  %v141 = vmul.f32 %v137, %v128
  %v142 = vmul.f32 %v140, %v128
  %v143 = vadd.f32 %v141, 1e-12
  %v144 = vadd.f32 %v142, 1e-12
  %v145 = vrsqrt.pop %v143
  %v146 = vrsqrt.pop %v144
  %v147 = vmul.f32 %v131, %v145
  %v148 = vmul.f32 %v132, %v146
  %v149 = vld [vmem:[%s4] sm:$0x1]
  %v151 = vlaneseq
  %v152 = vshrl.u32 %v151, 7
  %v153 = vsub.s32 0, %v152
  %v154 = vrot.slane %v149, %v153
  %v156 = vmul.f32 %v147, %v154
  %v157 = vmul.f32 %v148, %v154
  %v158 = vld [vmem:[%s5] sm:$0x1]
  %v160 = vlaneseq
  %v161 = vshrl.u32 %v160, 7
  %v162 = vsub.s32 0, %v161
  %v163 = vrot.slane %v158, %v162
  %v165 = vadd.f32 %v156, %v163
  %v166 = vadd.f32 %v157, %v163
  %v167 = vpack.c.bf16 %v166, %v165
  %v169 = vunpack.c.l.b16 %v167
  %v170 = vunpack.c.h.b16 %v167
  %v171 = vpack.c.b16 %v169, %v169
  %v172 = vpack.c.b16 %v170, %v170
  %vm175 = vcmask 257024
  %176 = vst.msk [vmem:[%s6] sm:$0xf] %vm175, %v171
  %177 = vst.msk [vmem:[%s6 + $0x4] sm:$0xf] %vm175, %v172
  // Predicated region
  $region26: #{text_forward.17} parent=0 // pred_check
    _
  $region27: #{text_forward.17} parent=0 // pred_check_branch
    %179 = sbr.rel (0) target = $region29
  $region28: #{text_forward.17} parent=0 // pred_region
    _
  $region29: #{text_forward.17} parent=0 // pred_fallthru
    _
  // Predicated region
  $region30: #{text_forward.17} parent=0 // pred_check
    _
  $region31: #{text_forward.17} parent=0 // pred_check_branch
    %181 = sbr.rel (0) target = $region33
  $region32: #{text_forward.17} parent=0 // pred_region
    _
  $region33: #{text_forward.17} parent=0 // pred_fallthru
    _

</llo_original>
